<compile_context>
chip_gen: v7x
topology: tpu7x:2x2x1
jax: 0.10.0
libtpu: 0.0.40
codegen_flags: <defaults>
</compile_context>

<pallas_src>
import math

import numpy as np
import jax
import jax.numpy as jnp
from jax.experimental import pallas as pl
from jax.experimental.pallas import tpu as pltpu


def _round_up(x, m):
    return ((x + m - 1) // m) * m


# -----------------------------------------------------------------------------
# Pallas kernel.  Batch on lanes everywhere:
#   lin_ref : (8, TB)  f32  rows = [vd0, vd1, vd2, f0, f1, f2, f3, 0]
#   pe_ref  : (8, TB)  f32  rows = [f0*1, f1*1, f2*1, f3*1, f0*2, f1*2, f2*2, f3*2]
#   w_lin   : (C, 8)   bf16 layer-0 weight columns for the linear inputs
#   w_sin   : (C, 8)   bf16 layer-0 weight columns for sin(pe)
#   w_cos   : (C, 8)   bf16 layer-0 weight columns for cos(pe)
#   w1, w2  : (C, C)   bf16 torch (out, in) layout -> h_new = W @ h
#   w3      : (2, C)   bf16
#   b*      : (C, 1) / (2, 1) f32 (broadcast over lanes)
#   out_ref : (2, TB)  f32  row 0 = sigvis = sigmoid(logit0), row 1 = eterm = exp(logit1)
# -----------------------------------------------------------------------------
def visibility_mlp_kernel(lin_ref, pe_ref,
                          w_lin_ref, w_sin_ref, w_cos_ref, b0_ref,
                          w1_ref, b1_ref,
                          w2_ref, b2_ref,
                          w3_ref, b3_ref,
                          out_ref):
    f32 = jnp.float32
    mxu = w1_ref.dtype            # bf16 MXU inputs, f32 accumulation

    lin = lin_ref[...]            # (8, TB) f32
    pe = pe_ref[...]              # (8, TB) f32
    s = jnp.sin(pe)               # EUP slot is otherwise idle -> ~free
    c = jnp.cos(pe)

    # Layer 0 as three K=8 partial matmuls (same math as one K=24 matmul, but
    # avoids any in-kernel concatenation).  M = C = 128, N = TB (lane-dense).
    h = jnp.dot(w_lin_ref[...], lin.astype(mxu), preferred_element_type=f32)
    h = h + jnp.dot(w_sin_ref[...], s.astype(mxu), preferred_element_type=f32)
    h = h + jnp.dot(w_cos_ref[...], c.astype(mxu), preferred_element_type=f32)
    h = jnp.maximum(h + b0_ref[...], 0.0)

    h = jnp.dot(w1_ref[...], h.astype(mxu), preferred_element_type=f32) + b1_ref[...]
    h = jnp.maximum(h, 0.0)

    h = jnp.dot(w2_ref[...], h.astype(mxu), preferred_element_type=f32) + b2_ref[...]
    h = jnp.maximum(h, 0.0)

    logits = jnp.dot(w3_ref[...], h.astype(mxu),
                     preferred_element_type=f32) + b3_ref[...]          # (2, TB)

    # row 0 -> sigvis = sigmoid; row 1 -> eterm = exp.  Evaluating both
    # transcendentals over the tiny (2, TB) block is negligible on the idle EUP
    # and keeps the epilogue a single dense (2, TB) store.
    row = jax.lax.broadcasted_iota(jnp.int32, logits.shape, 0)
    out_ref[...] = jnp.where(row == 0, jax.nn.sigmoid(logits), jnp.exp(logits))


def run_visibility_mlp(lin_t, pe_t, kparams, *, tile_b):
    """lin_t/pe_t: (rows, B_pad) f32, B_pad a multiple of tile_b."""
    (w_lin, w_sin, w_cos, b0, w1, b1, w2, b2, w3, b3) = kparams
    nlin_pad, B_pad = lin_t.shape
    npe_pad = pe_t.shape[0]
    C = w1.shape[0]
    assert B_pad % tile_b == 0 and tile_b % 128 == 0
    grid = (B_pad // tile_b,)

    def data_spec(rows):
        return pl.BlockSpec((rows, tile_b), lambda i: (0, i))

    def const_spec(shape):                    # weights / biases: DMA'd once
        return pl.BlockSpec(shape, lambda i: (0, 0))

    flops = 2 * B_pad * C * (nlin_pad + 2 * npe_pad + 2 * C + 2)
    transcendentals = B_pad * (2 * npe_pad + 3)
    weight_bytes = sum(int(a.size) * a.dtype.itemsize
                       for a in (w_lin, w_sin, w_cos, b0, w1, b1, w2, b2, w3, b3))
    bytes_accessed = (int(lin_t.size) * 4 + int(pe_t.size) * 4
                      + 2 * B_pad * 4 + weight_bytes)

    out = pl.pallas_call(
        visibility_mlp_kernel,
        out_shape=jax.ShapeDtypeStruct((2, B_pad), jnp.float32),
        grid_spec=pltpu.PrefetchScalarGridSpec(
            num_scalar_prefetch=0,
            grid=grid,
            in_specs=[
                data_spec(nlin_pad),                       # lin_t
                data_spec(npe_pad),                        # pe_t
                const_spec((C, nlin_pad)),                 # w_lin
                const_spec((C, npe_pad)),                  # w_sin
                const_spec((C, npe_pad)),                  # w_cos
                const_spec((C, 1)),                        # b0
                const_spec((C, C)), const_spec((C, 1)),    # w1, b1
                const_spec((C, C)), const_spec((C, 1)),    # w2, b2
                const_spec((2, C)), const_spec((2, 1)),    # w3, b3
            ],
            out_specs=pl.BlockSpec((2, tile_b), lambda i: (0, i)),
        ),
        compiler_params=pltpu.CompilerParams(
            dimension_semantics=("parallel",),             # megacore / v7x 2-TC shard
            vmem_limit_bytes=32 * 1024 * 1024),
        cost_estimate=pl.CostEstimate(flops=flops,
                                      transcendentals=transcendentals,
                                      bytes_accessed=bytes_accessed),
    )(lin_t, pe_t, w_lin, w_sin, w_cos, b0, w1, b1, w2, b2, w3, b3)
    return out    # (2, B_pad): row 0 = sigvis, row 1 = eterm


# -----------------------------------------------------------------------------
# Parameters: torch layout ((out, in) weights), converted once to kernel layout.
# -----------------------------------------------------------------------------
def init_params_torch(key, in_channels, feape=2, featureC=128, num_layers=4):
    """Mirrors VisibilityMLP.__init__: xavier_uniform(gain=sqrt(2)) weights,
    default torch Linear bias init, last-layer bias = -2."""
    in_mlpC = 3 + (2 * feape * in_channels + in_channels if feape > -1 else 0)
    dims = [in_mlpC] + [featureC] * (num_layers - 1) + [2]
    gain = math.sqrt(2.0)
    keys = jax.random.split(key, 2 * num_layers)
    params = []
    for i in range(num_layers):
        fan_in, fan_out = dims[i], dims[i + 1]
        wb = gain * math.sqrt(6.0 / (fan_in + fan_out))
        W = jax.random.uniform(keys[2 * i], (fan_out, fan_in), jnp.float32, -wb, wb)
        bb = 1.0 / math.sqrt(fan_in)
        b = jax.random.uniform(keys[2 * i + 1], (fan_out,), jnp.float32, -bb, bb)
        params.append((W, b))
    W_last, b_last = params[-1]
    params[-1] = (W_last, jnp.full_like(b_last, -2.0))   # torch constant_(bias, -2)
    return params


def prepare_kernel_params(torch_params, in_channels, feape, mxu_dtype=jnp.bfloat16):
    """Convert torch-layout params to the transposed / band-major kernel layout."""
    (W0, b0), (W1, b1), (W2, b2), (W3, b3) = torch_params
    C = W0.shape[0]
    nlin = 3 + in_channels
    nlin_pad = _round_up(nlin, 8)
    npe = feape * in_channels
    npe_pad = _round_up(max(npe, 1), 8)

    # torch layer-0 input columns: [vd(3), feat(in), sin(pe interleaved),
    # cos(pe interleaved)] with interleaved pe column = c*feape + f.  The kernel
    # uses band-major pe rows (f*in_ch + c), so permute the sin/cos columns.
    sin_cols = np.array([nlin + c * feape + f
                         for f in range(feape) for c in range(in_channels)])
    cos_cols = sin_cols + in_channels * feape

    w_lin = jnp.zeros((C, nlin_pad), jnp.float32).at[:, :nlin].set(W0[:, :nlin])
    w_sin = jnp.zeros((C, npe_pad), jnp.float32).at[:, :npe].set(W0[:, sin_cols])
    w_cos = jnp.zeros((C, npe_pad), jnp.float32).at[:, :npe].set(W0[:, cos_cols])

    f32 = jnp.float32
    return (w_lin.astype(mxu_dtype), w_sin.astype(mxu_dtype), w_cos.astype(mxu_dtype),
            b0[:, None].astype(f32),
            W1.astype(mxu_dtype), b1[:, None].astype(f32),
            W2.astype(mxu_dtype), b2[:, None].astype(f32),
            W3.astype(mxu_dtype), b3[:, None].astype(f32))


# -----------------------------------------------------------------------------
# Forward wrapper (positional encoding / concat / activations all in-kernel).
# -----------------------------------------------------------------------------
def visibility_mlp_forward(pts, viewdirs, features, torch_params, feape=2,
                           tile_b=1024):
    """Reproduces VisibilityMLP.forward (view_encoder=None): returns (eterm, sigvis)."""
    _ = pts[..., :3]          # pts is sliced but unused by the torch MLP path
    # TODO(synk): view_encoder branch not implemented (view_encoder=None here).
    B = viewdirs.shape[0]
    in_ch = features.shape[-1]
    kparams = prepare_kernel_params(torch_params, in_ch, feape)
    nlin = 3 + in_ch
    nlin_pad = kparams[0].shape[1]
    npe = feape * in_ch
    npe_pad = kparams[1].shape[1]

    # tile_b: large enough to amortize the ~0.35us per-grid-step overhead, but
    # capped near B (rounded to 256 so the MXU N dim stays full).  For big
    # batches on v7x keep B_pad / tile_b >= 2 so both TensorCores get work.
    tile_b_eff = max(256, min(tile_b, _round_up(B, 256)))
    B_pad = _round_up(B, tile_b_eff)

    vd_t = viewdirs.astype(jnp.float32).T                   # (3, B)
    ft_t = features.astype(jnp.float32).T                   # (in_ch, B)

    lin_parts = [vd_t, ft_t]
    if nlin_pad > nlin:
        lin_parts.append(jnp.zeros((nlin_pad - nlin, B), jnp.float32))
    lin_t = jnp.concatenate(lin_parts, axis=0)

    pe_parts = [ft_t * (2.0 ** f) for f in range(feape)] if feape > 0 else []
    if npe_pad > npe or not pe_parts:
        pe_parts.append(jnp.zeros((npe_pad - npe, B), jnp.float32))
    pe_t = jnp.concatenate(pe_parts, axis=0)

    lin_t = jnp.pad(lin_t, ((0, 0), (0, B_pad - B)))
    pe_t = jnp.pad(pe_t, ((0, 0), (0, B_pad - B)))

    out = run_visibility_mlp(lin_t, pe_t, kparams, tile_b=tile_b_eff)
    sigvis = out[0, :B]
    eterm = out[1, :B]
    return eterm, sigvis


# -----------------------------------------------------------------------------
# Pure-JAX reference (torch math / ordering, same bf16 cast points as kernel).
# -----------------------------------------------------------------------------
def positional_encoding(positions, freqs):
    freq_bands = 2.0 ** jnp.arange(freqs, dtype=jnp.float32)
    pts = (positions[..., None] * freq_bands).reshape(
        positions.shape[:-1] + (freqs * positions.shape[-1],))
    return jnp.concatenate([jnp.sin(pts), jnp.cos(pts)], axis=-1)


def reference_forward(pts, viewdirs, features, torch_params, feape=2):
    _ = pts[..., :3]
    x = jnp.concatenate([viewdirs, features, positional_encoding(features, feape)],
                        axis=-1).astype(jnp.float32)
    h = x
    n = len(torch_params)
    for i, (W, b) in enumerate(torch_params):
        h = jnp.dot(h.astype(jnp.bfloat16), W.astype(jnp.bfloat16).T,
                    preferred_element_type=jnp.float32) + b
        if i < n - 1:
            h = jnp.maximum(h, 0.0)
    sigvis = jax.nn.sigmoid(h[:, 0])
    eterm = jnp.exp(h[:, 1])
    return eterm, sigvis


if __name__ == "__main__":
    B = 100                      # deliberately not a multiple of the tile size
    in_channels = 4
    feape = 2
    featureC = 128

    key = jax.random.PRNGKey(0)
    kp, kpts, kvd, kfeat = jax.random.split(key, 4)

    torch_params = init_params_torch(kp, in_channels, feape=feape,
                                     featureC=featureC, num_layers=4)

    pts = jax.random.normal(kpts, (B, 3), jnp.float32)
    viewdirs = jax.random.normal(kvd, (B, 3), jnp.float32)
    viewdirs = viewdirs / jnp.linalg.norm(viewdirs, axis=-1, keepdims=True)
    features = jax.random.normal(kfeat, (B, in_channels), jnp.float32)

    eterm, sigvis = visibility_mlp_forward(pts, viewdirs, features, torch_params,
                                           feape=feape)
    eterm = jax.block_until_ready(eterm)
    sigvis = jax.block_until_ready(sigvis)

    eterm_ref, sigvis_ref = reference_forward(pts, viewdirs, features,
                                              torch_params, feape=feape)
    assert eterm.shape == (B,) and sigvis.shape == (B,)
    assert jnp.allclose(sigvis, sigvis_ref, atol=5e-3, rtol=5e-3), (
        "sigvis max err", float(jnp.max(jnp.abs(sigvis - sigvis_ref))))
    assert jnp.allclose(eterm, eterm_ref, atol=5e-3, rtol=5e-3), (
        "eterm max err", float(jnp.max(jnp.abs(eterm - eterm_ref))))

    print("KERNEL_OK")
</pallas_src>

<mosaic_0001>
module attributes {stable_mosaic.version = 11 : i64} {
  func.func @visibility_mlp_kernel(%arg0: i32, %arg1: memref<8x256xf32, #tpu.memory_space<vmem>>, %arg2: memref<8x256xf32, #tpu.memory_space<vmem>>, %arg3: memref<128x8xbf16, #tpu.memory_space<vmem>>, %arg4: memref<128x8xbf16, #tpu.memory_space<vmem>>, %arg5: memref<128x8xbf16, #tpu.memory_space<vmem>>, %arg6: memref<128x1xf32, #tpu.memory_space<vmem>>, %arg7: memref<128x128xbf16, #tpu.memory_space<vmem>>, %arg8: memref<128x1xf32, #tpu.memory_space<vmem>>, %arg9: memref<128x128xbf16, #tpu.memory_space<vmem>>, %arg10: memref<128x1xf32, #tpu.memory_space<vmem>>, %arg11: memref<2x128xbf16, #tpu.memory_space<vmem>>, %arg12: memref<2x1xf32, #tpu.memory_space<vmem>>, %arg13: memref<2x256xf32, #tpu.memory_space<vmem>>) attributes {dimension_semantics = [#tpu.dimension_semantics<parallel>], iteration_bounds = array<i64: 1>, scalar_prefetch = 0 : i64, scratch_operands = 0 : i64, tpu.core_type = #tpu.core_type<tc>, window_params = [{transform_indices = @transform_0, window_bounds = array<i64: 8, 256>}, {transform_indices = @transform_1, window_bounds = array<i64: 8, 256>}, {pipeline_mode = #tpu.pipeline_mode<synchronous>, transform_indices = @transform_2, window_bounds = array<i64: 128, 8>}, {pipeline_mode = #tpu.pipeline_mode<synchronous>, transform_indices = @transform_3, window_bounds = array<i64: 128, 8>}, {pipeline_mode = #tpu.pipeline_mode<synchronous>, transform_indices = @transform_4, window_bounds = array<i64: 128, 8>}, {pipeline_mode = #tpu.pipeline_mode<synchronous>, transform_indices = @transform_5, window_bounds = array<i64: 128, 1>}, {pipeline_mode = #tpu.pipeline_mode<synchronous>, transform_indices = @transform_6, window_bounds = array<i64: 128, 128>}, {pipeline_mode = #tpu.pipeline_mode<synchronous>, transform_indices = @transform_7, window_bounds = array<i64: 128, 1>}, {pipeline_mode = #tpu.pipeline_mode<synchronous>, transform_indices = @transform_8, window_bounds = array<i64: 128, 128>}, {pipeline_mode = #tpu.pipeline_mode<synchronous>, transform_indices = @transform_9, window_bounds = array<i64: 128, 1>}, {pipeline_mode = #tpu.pipeline_mode<synchronous>, transform_indices = @transform_10, window_bounds = array<i64: 2, 128>}, {pipeline_mode = #tpu.pipeline_mode<synchronous>, transform_indices = @transform_11, window_bounds = array<i64: 2, 1>}, {transform_indices = @transform_12, window_bounds = array<i64: 2, 256>}]} {
    %c0 = arith.constant 0 : index
    %c0_0 = arith.constant 0 : index
    %0 = vector.load %arg1[%c0, %c0_0] : memref<8x256xf32, #tpu.memory_space<vmem>>, vector<8x256xf32>
    %c0_1 = arith.constant 0 : index
    %c0_2 = arith.constant 0 : index
    %1 = vector.load %arg2[%c0_1, %c0_2] : memref<8x256xf32, #tpu.memory_space<vmem>>, vector<8x256xf32>
    %2 = math.sin %1 : vector<8x256xf32>
    %3 = math.cos %1 : vector<8x256xf32>
    %c0_3 = arith.constant 0 : index
    %c0_4 = arith.constant 0 : index
    %4 = vector.load %arg3[%c0_3, %c0_4] : memref<128x8xbf16, #tpu.memory_space<vmem>>, vector<128x8xbf16>
    %5 = arith.truncf %0 : vector<8x256xf32> to vector<8x256xbf16>
    %cst = arith.constant dense<0.000000e+00> : vector<128x256xf32>
    %6 = tpu.matmul %4, %5, %cst {dimension_numbers = #tpu.dot_dimension_numbers<[1], [0], [0], [1], [0, 0, 1, 1], [], []>} : vector<128x8xbf16>, vector<8x256xbf16>, vector<128x256xf32> -> vector<128x256xf32>
    %c0_5 = arith.constant 0 : index
    %c0_6 = arith.constant 0 : index
    %7 = vector.load %arg4[%c0_5, %c0_6] : memref<128x8xbf16, #tpu.memory_space<vmem>>, vector<128x8xbf16>
    %8 = arith.truncf %2 : vector<8x256xf32> to vector<8x256xbf16>
    %cst_7 = arith.constant dense<0.000000e+00> : vector<128x256xf32>
    %9 = tpu.matmul %7, %8, %cst_7 {dimension_numbers = #tpu.dot_dimension_numbers<[1], [0], [0], [1], [0, 0, 1, 1], [], []>} : vector<128x8xbf16>, vector<8x256xbf16>, vector<128x256xf32> -> vector<128x256xf32>
    %10 = arith.addf %6, %9 : vector<128x256xf32>
    %c0_8 = arith.constant 0 : index
    %c0_9 = arith.constant 0 : index
    %11 = vector.load %arg5[%c0_8, %c0_9] : memref<128x8xbf16, #tpu.memory_space<vmem>>, vector<128x8xbf16>
    %12 = arith.truncf %3 : vector<8x256xf32> to vector<8x256xbf16>
    %cst_10 = arith.constant dense<0.000000e+00> : vector<128x256xf32>
    %13 = tpu.matmul %11, %12, %cst_10 {dimension_numbers = #tpu.dot_dimension_numbers<[1], [0], [0], [1], [0, 0, 1, 1], [], []>} : vector<128x8xbf16>, vector<8x256xbf16>, vector<128x256xf32> -> vector<128x256xf32>
    %14 = arith.addf %10, %13 : vector<128x256xf32>
    %c0_11 = arith.constant 0 : index
    %c0_12 = arith.constant 0 : index
    %15 = vector.load %arg6[%c0_11, %c0_12] : memref<128x1xf32, #tpu.memory_space<vmem>>, vector<128x1xf32>
    %16 = vector.broadcast %15 : vector<128x1xf32> to vector<128x256xf32>
    %17 = arith.addf %14, %16 : vector<128x256xf32>
    %cst_13 = arith.constant 0.000000e+00 : f32
    %18 = vector.broadcast %cst_13 : f32 to vector<128x256xf32>
    %19 = arith.maximumf %17, %18 : vector<128x256xf32>
    %c0_14 = arith.constant 0 : index
    %c0_15 = arith.constant 0 : index
    %20 = vector.load %arg7[%c0_14, %c0_15] : memref<128x128xbf16, #tpu.memory_space<vmem>>, vector<128x128xbf16>
    %21 = arith.truncf %19 : vector<128x256xf32> to vector<128x256xbf16>
    %cst_16 = arith.constant dense<0.000000e+00> : vector<128x256xf32>
    %22 = tpu.matmul %20, %21, %cst_16 {dimension_numbers = #tpu.dot_dimension_numbers<[1], [0], [0], [1], [0, 0, 1, 1], [], []>} : vector<128x128xbf16>, vector<128x256xbf16>, vector<128x256xf32> -> vector<128x256xf32>
    %c0_17 = arith.constant 0 : index
    %c0_18 = arith.constant 0 : index
    %23 = vector.load %arg8[%c0_17, %c0_18] : memref<128x1xf32, #tpu.memory_space<vmem>>, vector<128x1xf32>
    %24 = vector.broadcast %23 : vector<128x1xf32> to vector<128x256xf32>
    %25 = arith.addf %22, %24 : vector<128x256xf32>
    %cst_19 = arith.constant 0.000000e+00 : f32
    %26 = vector.broadcast %cst_19 : f32 to vector<128x256xf32>
    %27 = arith.maximumf %25, %26 : vector<128x256xf32>
    %c0_20 = arith.constant 0 : index
    %c0_21 = arith.constant 0 : index
    %28 = vector.load %arg9[%c0_20, %c0_21] : memref<128x128xbf16, #tpu.memory_space<vmem>>, vector<128x128xbf16>
    %29 = arith.truncf %27 : vector<128x256xf32> to vector<128x256xbf16>
    %cst_22 = arith.constant dense<0.000000e+00> : vector<128x256xf32>
    %30 = tpu.matmul %28, %29, %cst_22 {dimension_numbers = #tpu.dot_dimension_numbers<[1], [0], [0], [1], [0, 0, 1, 1], [], []>} : vector<128x128xbf16>, vector<128x256xbf16>, vector<128x256xf32> -> vector<128x256xf32>
    %c0_23 = arith.constant 0 : index
    %c0_24 = arith.constant 0 : index
    %31 = vector.load %arg10[%c0_23, %c0_24] : memref<128x1xf32, #tpu.memory_space<vmem>>, vector<128x1xf32>
    %32 = vector.broadcast %31 : vector<128x1xf32> to vector<128x256xf32>
    %33 = arith.addf %30, %32 : vector<128x256xf32>
    %cst_25 = arith.constant 0.000000e+00 : f32
    %34 = vector.broadcast %cst_25 : f32 to vector<128x256xf32>
    %35 = arith.maximumf %33, %34 : vector<128x256xf32>
    %c0_26 = arith.constant 0 : index
    %c0_27 = arith.constant 0 : index
    %36 = vector.load %arg11[%c0_26, %c0_27] : memref<2x128xbf16, #tpu.memory_space<vmem>>, vector<2x128xbf16>
    %37 = arith.truncf %35 : vector<128x256xf32> to vector<128x256xbf16>
    %cst_28 = arith.constant dense<0.000000e+00> : vector<2x256xf32>
    %38 = tpu.matmul %36, %37, %cst_28 {dimension_numbers = #tpu.dot_dimension_numbers<[1], [0], [0], [1], [0, 0, 1, 1], [], []>} : vector<2x128xbf16>, vector<128x256xbf16>, vector<2x256xf32> -> vector<2x256xf32>
    %c0_29 = arith.constant 0 : index
    %c0_30 = arith.constant 0 : index
    %39 = vector.load %arg12[%c0_29, %c0_30] : memref<2x1xf32, #tpu.memory_space<vmem>>, vector<2x1xf32>
    %40 = vector.broadcast %39 : vector<2x1xf32> to vector<2x256xf32>
    %41 = arith.addf %38, %40 : vector<2x256xf32>
    %42 = tpu.iota {dimensions = array<i32: 0>} : vector<2x256xi32>
    %c0_i32 = arith.constant 0 : i32
    %43 = vector.broadcast %c0_i32 : i32 to vector<2x256xi32>
    %44 = arith.cmpi eq, %42, %43 : vector<2x256xi32>
    %45 = arith.negf %41 : vector<2x256xf32>
    %46 = math.exp %45 : vector<2x256xf32>
    %cst_31 = arith.constant 1.000000e+00 : f32
    %47 = vector.broadcast %cst_31 : f32 to vector<2x256xf32>
    %48 = arith.addf %47, %46 : vector<2x256xf32>
    %49 = arith.divf %47, %48 : vector<2x256xf32>
    %50 = math.exp %41 : vector<2x256xf32>
    %51 = arith.select %44, %49, %50 : vector<2x256xi1>, vector<2x256xf32>
    %c0_32 = arith.constant 0 : index
    %c0_33 = arith.constant 0 : index
    %52 = vector.load %arg13[%c0_32, %c0_33] : memref<2x256xf32, #tpu.memory_space<vmem>>, vector<2x256xf32>
    tpu.vector_store %arg13[%c0_32, %c0_33], %51 {strides = array<i32>} : memref<2x256xf32, #tpu.memory_space<vmem>>, vector<2x256xf32>,
    return
  }
  func.func @transform_0(%arg0: i32) -> (i32, i32) {
    %c0_i32 = arith.constant 0 : i32
    %c0_i32_0 = arith.constant 0 : i32
    return %c0_i32, %arg0 : i32, i32
  }
  func.func @transform_1(%arg0: i32) -> (i32, i32) {
    %c0_i32 = arith.constant 0 : i32
    %c0_i32_0 = arith.constant 0 : i32
    return %c0_i32, %arg0 : i32, i32
  }
  func.func @transform_2(%arg0: i32) -> (i32, i32) {
    %c0_i32 = arith.constant 0 : i32
    %c0_i32_0 = arith.constant 0 : i32
    %c0_i32_1 = arith.constant 0 : i32
    return %c0_i32, %c0_i32_0 : i32, i32
  }
  func.func @transform_3(%arg0: i32) -> (i32, i32) {
    %c0_i32 = arith.constant 0 : i32
    %c0_i32_0 = arith.constant 0 : i32
    %c0_i32_1 = arith.constant 0 : i32
    return %c0_i32, %c0_i32_0 : i32, i32
  }
  func.func @transform_4(%arg0: i32) -> (i32, i32) {
    %c0_i32 = arith.constant 0 : i32
    %c0_i32_0 = arith.constant 0 : i32
    %c0_i32_1 = arith.constant 0 : i32
    return %c0_i32, %c0_i32_0 : i32, i32
  }
  func.func @transform_5(%arg0: i32) -> (i32, i32) {
    %c0_i32 = arith.constant 0 : i32
    %c0_i32_0 = arith.constant 0 : i32
    %c0_i32_1 = arith.constant 0 : i32
    return %c0_i32, %c0_i32_0 : i32, i32
  }
  func.func @transform_6(%arg0: i32) -> (i32, i32) {
    %c0_i32 = arith.constant 0 : i32
    %c0_i32_0 = arith.constant 0 : i32
    %c0_i32_1 = arith.constant 0 : i32
    return %c0_i32, %c0_i32_0 : i32, i32
  }
  func.func @transform_7(%arg0: i32) -> (i32, i32) {
    %c0_i32 = arith.constant 0 : i32
    %c0_i32_0 = arith.constant 0 : i32
    %c0_i32_1 = arith.constant 0 : i32
    return %c0_i32, %c0_i32_0 : i32, i32
  }
  func.func @transform_8(%arg0: i32) -> (i32, i32) {
    %c0_i32 = arith.constant 0 : i32
    %c0_i32_0 = arith.constant 0 : i32
    %c0_i32_1 = arith.constant 0 : i32
    return %c0_i32, %c0_i32_0 : i32, i32
  }
  func.func @transform_9(%arg0: i32) -> (i32, i32) {
    %c0_i32 = arith.constant 0 : i32
    %c0_i32_0 = arith.constant 0 : i32
    %c0_i32_1 = arith.constant 0 : i32
    return %c0_i32, %c0_i32_0 : i32, i32
  }
  func.func @transform_10(%arg0: i32) -> (i32, i32) {
    %c0_i32 = arith.constant 0 : i32
    %c0_i32_0 = arith.constant 0 : i32
    %c0_i32_1 = arith.constant 0 : i32
    return %c0_i32, %c0_i32_0 : i32, i32
  }
  func.func @transform_11(%arg0: i32) -> (i32, i32) {
    %c0_i32 = arith.constant 0 : i32
    %c0_i32_0 = arith.constant 0 : i32
    %c0_i32_1 = arith.constant 0 : i32
    return %c0_i32, %c0_i32_0 : i32, i32
  }
  func.func @transform_12(%arg0: i32) -> (i32, i32) {
    %c0_i32 = arith.constant 0 : i32
    %c0_i32_0 = arith.constant 0 : i32
    return %c0_i32, %arg0 : i32, i32
  }
}

</mosaic_0001>

<llo_original>
// kernel: tpu_custom_call.1
$region0: #{tpu_custom_call.1}
  #allocation0 [shape = 'u32[]', space=smem, size = 0x4, offset = 0x4, fixed_abs, tag = 'smem constant byte address 0x4 - core index']
  #allocation1 [shape = 'u32[144,128]{1,0:T(1,128)}', space=vmem, size = 0x12000, scoped, tag = 'internal scratch']
  %s0 = inlined_call_operand.vmem [shape: f32[8,256], index: 0, kind: input, shape index: {}]
  %s1 = inlined_call_operand.vmem [shape: f32[8,256], index: 1, kind: input, shape index: {}]
  %s2 = inlined_call_operand.vmem [shape: bf16[128,8], index: 2, kind: input, shape index: {}]
  %s3 = inlined_call_operand.vmem [shape: bf16[128,8], index: 3, kind: input, shape index: {}]
  %s4 = inlined_call_operand.vmem [shape: bf16[128,8], index: 4, kind: input, shape index: {}]
  %s5 = inlined_call_operand.vmem [shape: f32[128,1], index: 5, kind: input, shape index: {}]
  %s6 = inlined_call_operand.vmem [shape: bf16[128,128], index: 6, kind: input, shape index: {}]
  %s7 = inlined_call_operand.vmem [shape: f32[128,1], index: 7, kind: input, shape index: {}]
  %s8 = inlined_call_operand.vmem [shape: bf16[128,128], index: 8, kind: input, shape index: {}]
  %s9 = inlined_call_operand.vmem [shape: f32[128,1], index: 9, kind: input, shape index: {}]
  %s10 = inlined_call_operand.vmem [shape: bf16[2,128], index: 10, kind: input, shape index: {}]
  %s11 = inlined_call_operand.vmem [shape: f32[2,1], index: 11, kind: input, shape index: {}]
  %s12 = inlined_call_operand.hbm [shape: f32[2,256], index: 12, kind: output, shape index: {}]
  %s13 = sld [smem:[#allocation0]]
  $region58: #{tpu_custom_call.1} parent=0
    _
  %s15 = ssub.s32 1, %s13
  %s16 = scalar_select 0, %s15, %s13
  $region1: #{tpu_custom_call.1} parent=0
    #allocation2 [shape = 'u8[2048]{0}', space=vmem, size = 0x800, scoped, tag = 'output window, operand 0, single buffered']
    #allocation3 [shape = 's32[1]{0}', space=sflag, size = 0x4, scoped, tag = 'scoped memory for tpu_custom_call.1']
    %17 = vsyncpa [#allocation3], 0
    // Predicated region
    $region2: #{tpu_custom_call.1} parent=1 // pred_check
      _
    $region3: #{tpu_custom_call.1} parent=1 // pred_check_branch
      %19 = sbr.rel (0) target = $region5
    $region4: #{tpu_custom_call.1} parent=1 // pred_region
      _
    $region5: #{tpu_custom_call.1} parent=1 // pred_fallthru
      _
    // Predicated region
    $region6: #{tpu_custom_call.1} parent=1 // pred_check
      _
    $region7: #{tpu_custom_call.1} parent=1 // pred_check_branch
      %21 = sbr.rel (0) target = $region9
    $region8: #{tpu_custom_call.1} parent=1 // pred_region
      _
    $region9: #{tpu_custom_call.1} parent=1 // pred_fallthru
      _
    // Predicated region
    $region10: #{tpu_custom_call.1} parent=1 // pred_check
      _
    $region11: #{tpu_custom_call.1} parent=1 // pred_check_branch
      %23 = sbr.rel (0) target = $region13
    $region12: #{tpu_custom_call.1} parent=1 // pred_region
      _
    $region13: #{tpu_custom_call.1} parent=1 // pred_fallthru
      _
    // Predicated region
    $region14: #{tpu_custom_call.1} parent=1 // pred_check
      _
    $region15: #{tpu_custom_call.1} parent=1 // pred_check_branch
      %25 = sbr.rel (0) target = $region17
    $region16: #{tpu_custom_call.1} parent=1 // pred_region
      _
    $region17: #{tpu_custom_call.1} parent=1 // pred_fallthru
      _
    // Predicated region
    $region18: #{tpu_custom_call.1} parent=1 // pred_check
      _
    $region19: #{tpu_custom_call.1} parent=1 // pred_check_branch
      %27 = sbr.rel (0) target = $region21
    $region20: #{tpu_custom_call.1} parent=1 // pred_region
      _
    $region21: #{tpu_custom_call.1} parent=1 // pred_fallthru
      _
    // Predicated region
    $region22: #{tpu_custom_call.1} parent=1 // pred_check
      _
    $region23: #{tpu_custom_call.1} parent=1 // pred_check_branch
      %29 = sbr.rel (0) target = $region25
    $region24: #{tpu_custom_call.1} parent=1 // pred_region
      _
    $region25: #{tpu_custom_call.1} parent=1 // pred_fallthru
      _
    // Predicated region
    $region26: #{tpu_custom_call.1} parent=1 // pred_check
      _
    $region27: #{tpu_custom_call.1} parent=1 // pred_check_branch
      %31 = sbr.rel (0) target = $region29
    $region28: #{tpu_custom_call.1} parent=1 // pred_region
      _
    $region29: #{tpu_custom_call.1} parent=1 // pred_fallthru
      _
    // Predicated region
    $region30: #{tpu_custom_call.1} parent=1 // pred_check
      _
    $region31: #{tpu_custom_call.1} parent=1 // pred_check_branch
      %33 = sbr.rel (0) target = $region33
    $region32: #{tpu_custom_call.1} parent=1 // pred_region
      _
    $region33: #{tpu_custom_call.1} parent=1 // pred_fallthru
      _
    // Predicated region
    $region34: #{tpu_custom_call.1} parent=1 // pred_check
      _
    $region35: #{tpu_custom_call.1} parent=1 // pred_check_branch
      %35 = sbr.rel (0) target = $region37
    $region36: #{tpu_custom_call.1} parent=1 // pred_region
      _
    $region37: #{tpu_custom_call.1} parent=1 // pred_fallthru
      _
    // Predicated region
    $region38: #{tpu_custom_call.1} parent=1 // pred_check
      _
    $region39: #{tpu_custom_call.1} parent=1 // pred_check_branch
      %37 = sbr.rel (0) target = $region41
    $region40: #{tpu_custom_call.1} parent=1 // pred_region
      _
    $region41: #{tpu_custom_call.1} parent=1 // pred_fallthru
      _
    // Predicated region
    $region42: #{tpu_custom_call.1} parent=1 // pred_check
      _
    $region43: #{tpu_custom_call.1} parent=1 // pred_check_branch
      %39 = sbr.rel (0) target = $region45
    $region44: #{tpu_custom_call.1} parent=1 // pred_region
      _
    $region45: #{tpu_custom_call.1} parent=1 // pred_fallthru
      _
    // Predicated region
    $region46: #{tpu_custom_call.1} parent=1 // pred_check
      _
    $region47: #{tpu_custom_call.1} parent=1 // pred_check_branch
      %41 = sbr.rel (0) target = $region49
    $region48: #{tpu_custom_call.1} parent=1 // pred_region
      _
    $region49: #{tpu_custom_call.1} parent=1 // pred_fallthru
      _
    %v43 = vld [vmem:[%s0] sm:$0xff]
    %v44 = vld [vmem:[%s0 + $0x8] sm:$0xff]
    %v45 = vld [vmem:[%s1] sm:$0xff]
    %v46 = vld [vmem:[%s1 + $0x8] sm:$0xff]
    %v47 = vand.u32 2147483647, %v45
    %vm48 = vcmp.le.f32.partialorder %v47, 0.7853982
    %vm49 = vcmp.lt.s32.totalorder %v45, 0
    %v50 = vand.u32 %v45, 2139095040
    %v51 = vshrl.u32 %v50, 23
    %v52 = vsub.s32 %v51, 127
    %v53 = vand.u32 2147483647, %v45
    %v54 = vand.u32 %v53, 8388607
    %v55 = vor.u32 %v54, 8388608
    %v56 = vsub.s32 0, %v55
    %v57 = vadd.s32 %v52, 1
    %vm58 = vcmp.gt.s32.totalorder %v57, 0
    %v59 = vsel %vm58, %v57, 0
    %v60 = vshrl.u32 %v59, 5
    %v61 = vand.u32 %v59, 31
    %v62 = vsub.s32 32, %v61
    %v63 = vshrl.u32 683565275, %v62
    %v64 = vshll.u32 683565275, %v61
    %v65 = vshrl.u32 2475754826, %v62
    %v66 = vor.u32 %v64, %v65
    %v67 = vshll.u32 2475754826, %v61
    %v68 = vshrl.u32 2131351028, %v62
    %v69 = vor.u32 %v67, %v68
    %v70 = vshll.u32 2131351028, %v61
    %v71 = vshrl.u32 2102212464, %v62
    %v72 = vor.u32 %v70, %v71
    %v73 = vshll.u32 2102212464, %v61
    %v74 = vshrl.u32 920167782, %v62
    %v75 = vor.u32 %v73, %v74
    %v76 = vshll.u32 920167782, %v61
    %v77 = vshrl.u32 1326507024, %v62
    %v78 = vor.u32 %v76, %v77
    %vm79 = vcmp.lt.s32.totalorder %v60, 1
    %vm80 = vcmp.lt.s32.totalorder %v60, 2
    %vm81 = vcmp.lt.s32.totalorder %v60, 3
    %vm82 = vcmp.lt.s32.totalorder %v60, 4
    %v83 = vsel %vm79, %v63, %v66
    %v84 = vsel %vm82, %v72, 2102212464
    %v85 = vsel %vm81, %v69, %v84
    %v86 = vsel %vm80, %v83, %v85
    %v87 = vsel %vm79, %v66, %v69
    %v88 = vsel %vm82, %v75, 920167782
    %v89 = vsel %vm81, %v72, %v88
    %v90 = vsel %vm80, %v87, %v89
    %v91 = vsel %vm79, %v69, %v72
    %v92 = vsel %vm82, %v78, 1326507024
    %v93 = vsel %vm81, %v75, %v92
    %v94 = vsel %vm80, %v91, %v93
    %v95 = vshll.u32 %v55, 8
    %v96 = vmul.u32.u64.compose %v95, %v94
    %v97 = vextract.low.u32 %v96
    %v98 = vextract.high.u32 %v96
    %v99 = vmul.u32.u64.compose %v95, %v90
    %v100 = vextract.low.u32 %v99
    %v101 = vextract.high.u32 %v99
    %v102 = vmul.u32 %v95, %v86
    %v103 = vadd.s32 %v98, %v100
    %vm104 = vc.u32 %v98, %v100
    %v105 = vadd.s32 %v101, 1
    %v106 = vsel %vm104, %v105, %v101
    %v107 = vadd.s32 %v102, %v106
    %v108 = vadd.s32 %v107, 536870912
    %v109 = vshrl.u32 %v108, 30
    %v110 = vshll.u32 %v109, 30
    %v111 = vsub.s32 %v107, %v110
    %vm112 = vcmp.lt.s32.totalorder %v111, 0
    %v113 = vsub.s32 0, %v111
    %v114 = vsel %vm112, %v113, %v111
    %v115 = vclz %v114
    %v116 = vsub.s32 %v115, 2
    %vm117 = vcmp.gt.s32.totalorder 0, %v116
    %v118 = vsel %vm117, 0, %v116
    %v119 = vsub.s32 32, %v118
    %v120 = vshll.u32 %v111, %v118
    %v121 = vshrl.u32 %v103, %v119
    %v122 = vor.u32 %v120, %v121
    %v123 = vsub.s32 4294967266, %v118
    %v124 = vadd.s32 %v123, 127
    %v125 = vshll.u32 %v124, 23
    %v126 = vor.u32 4788187, %v125
    %v127 = vand.u32 2147483647, %v126
    %v129 = vcvt.s32.f32 %v122
    %v130 = vmul.f32 %v129, %v127
    %v131 = vxor.u32 %v130, 2147483648
    %v132 = vsel %vm49, %v131, %v130
    %v133 = vsub.s32 4, %v109
    %v134 = vsel %vm49, %v133, %v109
    %v135 = vsel %vm48, %v45, %v132
    %v136 = vsel %vm48, 0, %v134
    %v137 = vcosq.f32.pop %v135
    %v138 = vsinq.f32.pop %v135
    %vm139 = vweird.f32 %v45
    %v140 = vadd.s32 %v136, 3
    %v141 = vand.u32 %v140, 3
    %vm142 = vcmp.lt.s32.totalorder %v141, 2
    %vm143 = vcmp.eq.s32.totalorder %v141, 0
    %v144 = vxor.u32 %v138, 2147483648
    %v145 = vsel %vm143, %v137, %v144
    %vm146 = vcmp.eq.s32.totalorder %v141, 2
    %v147 = vxor.u32 %v137, 2147483648
    %v148 = vsel %vm146, %v147, %v138
    %v149 = vsel %vm142, %v145, %v148
    %v150 = vsel %vm139, nan, %v149
    %v151 = vand.u32 2147483647, %v46
    %vm152 = vcmp.le.f32.partialorder %v151, 0.7853982
    %vm153 = vcmp.lt.s32.totalorder %v46, 0
    %v154 = vand.u32 %v46, 2139095040
    %v155 = vshrl.u32 %v154, 23
    %v156 = vsub.s32 %v155, 127
    %v157 = vand.u32 2147483647, %v46
    %v158 = vand.u32 %v157, 8388607
    %v159 = vor.u32 %v158, 8388608
    %v160 = vsub.s32 0, %v159
    %v161 = vadd.s32 %v156, 1
    %vm162 = vcmp.gt.s32.totalorder %v161, 0
    %v163 = vsel %vm162, %v161, 0
    %v164 = vshrl.u32 %v163, 5
    %v165 = vand.u32 %v163, 31
    %v166 = vsub.s32 32, %v165
    %v167 = vshrl.u32 683565275, %v166
    %v168 = vshll.u32 683565275, %v165
    %v169 = vshrl.u32 2475754826, %v166
    %v170 = vor.u32 %v168, %v169
    %v171 = vshll.u32 2475754826, %v165
    %v172 = vshrl.u32 2131351028, %v166
    %v173 = vor.u32 %v171, %v172
    %v174 = vshll.u32 2131351028, %v165
    %v175 = vshrl.u32 2102212464, %v166
    %v176 = vor.u32 %v174, %v175
    %v177 = vshll.u32 2102212464, %v165
    %v178 = vshrl.u32 920167782, %v166
    %v179 = vor.u32 %v177, %v178
    %v180 = vshll.u32 920167782, %v165
    %v181 = vshrl.u32 1326507024, %v166
    %v182 = vor.u32 %v180, %v181
    %vm183 = vcmp.lt.s32.totalorder %v164, 1
    %vm184 = vcmp.lt.s32.totalorder %v164, 2
    %vm185 = vcmp.lt.s32.totalorder %v164, 3
    %vm186 = vcmp.lt.s32.totalorder %v164, 4
    %v187 = vsel %vm183, %v167, %v170
    %v188 = vsel %vm186, %v176, 2102212464
    %v189 = vsel %vm185, %v173, %v188
    %v190 = vsel %vm184, %v187, %v189
    %v191 = vsel %vm183, %v170, %v173
    %v192 = vsel %vm186, %v179, 920167782
    %v193 = vsel %vm185, %v176, %v192
    %v194 = vsel %vm184, %v191, %v193
    %v195 = vsel %vm183, %v173, %v176
    %v196 = vsel %vm186, %v182, 1326507024
    %v197 = vsel %vm185, %v179, %v196
    %v198 = vsel %vm184, %v195, %v197
    %v199 = vshll.u32 %v159, 8
    %v200 = vmul.u32.u64.compose %v199, %v198
    %v201 = vextract.low.u32 %v200
    %v202 = vextract.high.u32 %v200
    %v203 = vmul.u32.u64.compose %v199, %v194
    %v204 = vextract.low.u32 %v203
    %v205 = vextract.high.u32 %v203
    %v206 = vmul.u32 %v199, %v190
    %v207 = vadd.s32 %v202, %v204
    %vm208 = vc.u32 %v202, %v204
    %v209 = vadd.s32 %v205, 1
    %v210 = vsel %vm208, %v209, %v205
    %v211 = vadd.s32 %v206, %v210
    %v212 = vadd.s32 %v211, 536870912
    %v213 = vshrl.u32 %v212, 30
    %v214 = vshll.u32 %v213, 30
    %v215 = vsub.s32 %v211, %v214
    %vm216 = vcmp.lt.s32.totalorder %v215, 0
    %v217 = vsub.s32 0, %v215
    %v218 = vsel %vm216, %v217, %v215
    %v219 = vclz %v218
    %v220 = vsub.s32 %v219, 2
    %vm221 = vcmp.gt.s32.totalorder 0, %v220
    %v222 = vsel %vm221, 0, %v220
    %v223 = vsub.s32 32, %v222
    %v224 = vshll.u32 %v215, %v222
    %v225 = vshrl.u32 %v207, %v223
    %v226 = vor.u32 %v224, %v225
    %v227 = vsub.s32 4294967266, %v222
    %v228 = vadd.s32 %v227, 127
    %v229 = vshll.u32 %v228, 23
    %v230 = vor.u32 4788187, %v229
    %v231 = vand.u32 2147483647, %v230
    %v233 = vcvt.s32.f32 %v226
    %v234 = vmul.f32 %v233, %v231
    %v235 = vxor.u32 %v234, 2147483648
    %v236 = vsel %vm153, %v235, %v234
    %v237 = vsub.s32 4, %v213
    %v238 = vsel %vm153, %v237, %v213
    %v239 = vsel %vm152, %v46, %v236
    %v240 = vsel %vm152, 0, %v238
    %v241 = vcosq.f32.pop %v239
    %v242 = vsinq.f32.pop %v239
    %vm243 = vweird.f32 %v46
    %v244 = vadd.s32 %v240, 3
    %v245 = vand.u32 %v244, 3
    %vm246 = vcmp.lt.s32.totalorder %v245, 2
    %vm247 = vcmp.eq.s32.totalorder %v245, 0
    %v248 = vxor.u32 %v242, 2147483648
    %v249 = vsel %vm247, %v241, %v248
    %vm250 = vcmp.eq.s32.totalorder %v245, 2
    %v251 = vxor.u32 %v241, 2147483648
    %v252 = vsel %vm250, %v251, %v242
    %v253 = vsel %vm246, %v249, %v252
    %v254 = vsel %vm243, nan, %v253
    %v255 = vand.u32 2147483647, %v45
    %vm256 = vcmp.le.f32.partialorder %v255, 0.7853982
    %vm257 = vcmp.lt.s32.totalorder %v45, 0
    %v258 = vand.u32 %v45, 2139095040
    %v259 = vshrl.u32 %v258, 23
    %v260 = vsub.s32 %v259, 127
    %v261 = vand.u32 2147483647, %v45
    %v262 = vand.u32 %v261, 8388607
    %v263 = vor.u32 %v262, 8388608
    %v264 = vsub.s32 0, %v263
    %v265 = vadd.s32 %v260, 1
    %vm266 = vcmp.gt.s32.totalorder %v265, 0
    %v267 = vsel %vm266, %v265, 0
    %v268 = vshrl.u32 %v267, 5
    %v269 = vand.u32 %v267, 31
    %v270 = vsub.s32 32, %v269
    %v271 = vshrl.u32 683565275, %v270
    %v272 = vshll.u32 683565275, %v269
    %v273 = vshrl.u32 2475754826, %v270
    %v274 = vor.u32 %v272, %v273
    %v275 = vshll.u32 2475754826, %v269
    %v276 = vshrl.u32 2131351028, %v270
    %v277 = vor.u32 %v275, %v276
    %v278 = vshll.u32 2131351028, %v269
    %v279 = vshrl.u32 2102212464, %v270
    %v280 = vor.u32 %v278, %v279
    %v281 = vshll.u32 2102212464, %v269
    %v282 = vshrl.u32 920167782, %v270
    %v283 = vor.u32 %v281, %v282
    %v284 = vshll.u32 920167782, %v269
    %v285 = vshrl.u32 1326507024, %v270
    %v286 = vor.u32 %v284, %v285
    %vm287 = vcmp.lt.s32.totalorder %v268, 1
    %vm288 = vcmp.lt.s32.totalorder %v268, 2
    %vm289 = vcmp.lt.s32.totalorder %v268, 3
    %vm290 = vcmp.lt.s32.totalorder %v268, 4
    %v291 = vsel %vm287, %v271, %v274
    %v292 = vsel %vm290, %v280, 2102212464
    %v293 = vsel %vm289, %v277, %v292
    %v294 = vsel %vm288, %v291, %v293
    %v295 = vsel %vm287, %v274, %v277
    %v296 = vsel %vm290, %v283, 920167782
    %v297 = vsel %vm289, %v280, %v296
    %v298 = vsel %vm288, %v295, %v297
    %v299 = vsel %vm287, %v277, %v280
    %v300 = vsel %vm290, %v286, 1326507024
    %v301 = vsel %vm289, %v283, %v300
    %v302 = vsel %vm288, %v299, %v301
    %v303 = vshll.u32 %v263, 8
    %v304 = vmul.u32.u64.compose %v303, %v302
    %v305 = vextract.low.u32 %v304
    %v306 = vextract.high.u32 %v304
    %v307 = vmul.u32.u64.compose %v303, %v298
    %v308 = vextract.low.u32 %v307
    %v309 = vextract.high.u32 %v307
    %v310 = vmul.u32 %v303, %v294
    %v311 = vadd.s32 %v306, %v308
    %vm312 = vc.u32 %v306, %v308
    %v313 = vadd.s32 %v309, 1
    %v314 = vsel %vm312, %v313, %v309
    %v315 = vadd.s32 %v310, %v314
    %v316 = vadd.s32 %v315, 536870912
    %v317 = vshrl.u32 %v316, 30
    %v318 = vshll.u32 %v317, 30
    %v319 = vsub.s32 %v315, %v318
    %vm320 = vcmp.lt.s32.totalorder %v319, 0
    %v321 = vsub.s32 0, %v319
    %v322 = vsel %vm320, %v321, %v319
    %v323 = vclz %v322
    %v324 = vsub.s32 %v323, 2
    %vm325 = vcmp.gt.s32.totalorder 0, %v324
    %v326 = vsel %vm325, 0, %v324
    %v327 = vsub.s32 32, %v326
    %v328 = vshll.u32 %v319, %v326
    %v329 = vshrl.u32 %v311, %v327
    %v330 = vor.u32 %v328, %v329
    %v331 = vsub.s32 4294967266, %v326
    %v332 = vadd.s32 %v331, 127
    %v333 = vshll.u32 %v332, 23
    %v334 = vor.u32 4788187, %v333
    %v335 = vand.u32 2147483647, %v334
    %v337 = vcvt.s32.f32 %v330
    %v338 = vmul.f32 %v337, %v335
    %v339 = vxor.u32 %v338, 2147483648
    %v340 = vsel %vm257, %v339, %v338
    %v341 = vsub.s32 4, %v317
    %v342 = vsel %vm257, %v341, %v317
    %v343 = vsel %vm256, %v45, %v340
    %v344 = vsel %vm256, 0, %v342
    %v345 = vcosq.f32.pop %v343
    %v346 = vsinq.f32.pop %v343
    %vm347 = vweird.f32 %v45
    %v348 = vand.u32 %v344, 3
    %vm349 = vcmp.lt.s32.totalorder %v348, 2
    %vm350 = vcmp.eq.s32.totalorder %v348, 0
    %v351 = vxor.u32 %v346, 2147483648
    %v352 = vsel %vm350, %v345, %v351
    %vm353 = vcmp.eq.s32.totalorder %v348, 2
    %v354 = vxor.u32 %v345, 2147483648
    %v355 = vsel %vm353, %v354, %v346
    %v356 = vsel %vm349, %v352, %v355
    %v357 = vsel %vm347, nan, %v356
    %v358 = vand.u32 2147483647, %v46
    %vm359 = vcmp.le.f32.partialorder %v358, 0.7853982
    %vm360 = vcmp.lt.s32.totalorder %v46, 0
    %v361 = vand.u32 %v46, 2139095040
    %v362 = vshrl.u32 %v361, 23
    %v363 = vsub.s32 %v362, 127
    %v364 = vand.u32 2147483647, %v46
    %v365 = vand.u32 %v364, 8388607
    %v366 = vor.u32 %v365, 8388608
    %v367 = vsub.s32 0, %v366
    %v368 = vadd.s32 %v363, 1
    %vm369 = vcmp.gt.s32.totalorder %v368, 0
    %v370 = vsel %vm369, %v368, 0
    %v371 = vshrl.u32 %v370, 5
    %v372 = vand.u32 %v370, 31
    %v373 = vsub.s32 32, %v372
    %v374 = vshrl.u32 683565275, %v373
    %v375 = vshll.u32 683565275, %v372
    %v376 = vshrl.u32 2475754826, %v373
    %v377 = vor.u32 %v375, %v376
    %v378 = vshll.u32 2475754826, %v372
    %v379 = vshrl.u32 2131351028, %v373
    %v380 = vor.u32 %v378, %v379
    %v381 = vshll.u32 2131351028, %v372
    %v382 = vshrl.u32 2102212464, %v373
    %v383 = vor.u32 %v381, %v382
    %v384 = vshll.u32 2102212464, %v372
    %v385 = vshrl.u32 920167782, %v373
    %v386 = vor.u32 %v384, %v385
    %v387 = vshll.u32 920167782, %v372
    %v388 = vshrl.u32 1326507024, %v373
    %v389 = vor.u32 %v387, %v388
    %vm390 = vcmp.lt.s32.totalorder %v371, 1
    %vm391 = vcmp.lt.s32.totalorder %v371, 2
    %vm392 = vcmp.lt.s32.totalorder %v371, 3
    %vm393 = vcmp.lt.s32.totalorder %v371, 4
    %v394 = vsel %vm390, %v374, %v377
    %v395 = vsel %vm393, %v383, 2102212464
    %v396 = vsel %vm392, %v380, %v395
    %v397 = vsel %vm391, %v394, %v396
    %v398 = vsel %vm390, %v377, %v380
    %v399 = vsel %vm393, %v386, 920167782
    %v400 = vsel %vm392, %v383, %v399
    %v401 = vsel %vm391, %v398, %v400
    %v402 = vsel %vm390, %v380, %v383
    %v403 = vsel %vm393, %v389, 1326507024
    %v404 = vsel %vm392, %v386, %v403
    %v405 = vsel %vm391, %v402, %v404
    %v406 = vshll.u32 %v366, 8
    %v407 = vmul.u32.u64.compose %v406, %v405
    %v408 = vextract.low.u32 %v407
    %v409 = vextract.high.u32 %v407
    %v410 = vmul.u32.u64.compose %v406, %v401
    %v411 = vextract.low.u32 %v410
    %v412 = vextract.high.u32 %v410
    %v413 = vmul.u32 %v406, %v397
    %v414 = vadd.s32 %v409, %v411
    %vm415 = vc.u32 %v409, %v411
    %v416 = vadd.s32 %v412, 1
    %v417 = vsel %vm415, %v416, %v412
    %v418 = vadd.s32 %v413, %v417
    %v419 = vadd.s32 %v418, 536870912
    %v420 = vshrl.u32 %v419, 30
    %v421 = vshll.u32 %v420, 30
    %v422 = vsub.s32 %v418, %v421
    %vm423 = vcmp.lt.s32.totalorder %v422, 0
    %v424 = vsub.s32 0, %v422
    %v425 = vsel %vm423, %v424, %v422
    %v426 = vclz %v425
    %v427 = vsub.s32 %v426, 2
    %vm428 = vcmp.gt.s32.totalorder 0, %v427
    %v429 = vsel %vm428, 0, %v427
    %v430 = vsub.s32 32, %v429
    %v431 = vshll.u32 %v422, %v429
    %v432 = vshrl.u32 %v414, %v430
    %v433 = vor.u32 %v431, %v432
    %v434 = vsub.s32 4294967266, %v429
    %v435 = vadd.s32 %v434, 127
    %v436 = vshll.u32 %v435, 23
    %v437 = vor.u32 4788187, %v436
    %v438 = vand.u32 2147483647, %v437
    %v440 = vcvt.s32.f32 %v433
    %v441 = vmul.f32 %v440, %v438
    %v442 = vxor.u32 %v441, 2147483648
    %v443 = vsel %vm360, %v442, %v441
    %v444 = vsub.s32 4, %v420
    %v445 = vsel %vm360, %v444, %v420
    %v446 = vsel %vm359, %v46, %v443
    %v447 = vsel %vm359, 0, %v445
    %v448 = vcosq.f32.pop %v446
    %v449 = vsinq.f32.pop %v446
    %vm450 = vweird.f32 %v46
    %v451 = vand.u32 %v447, 3
    %vm452 = vcmp.lt.s32.totalorder %v451, 2
    %vm453 = vcmp.eq.s32.totalorder %v451, 0
    %v454 = vxor.u32 %v449, 2147483648
    %v455 = vsel %vm453, %v448, %v454
    %vm456 = vcmp.eq.s32.totalorder %v451, 2
    %v457 = vxor.u32 %v448, 2147483648
    %v458 = vsel %vm456, %v457, %v449
    %v459 = vsel %vm452, %v455, %v458
    %v460 = vsel %vm450, nan, %v459
    %v461 = vld [vmem:[%s2] sm:$0xf]
    %v462 = vld [vmem:[%s2 + $0x4] sm:$0xf]
    %v463 = vld [vmem:[%s2 + $0x8] sm:$0xf]
    %v464 = vld [vmem:[%s2 + $0xc] sm:$0xf]
    %v465 = vld [vmem:[%s2 + $0x10] sm:$0xf]
    %v466 = vld [vmem:[%s2 + $0x14] sm:$0xf]
    %v467 = vld [vmem:[%s2 + $0x18] sm:$0xf]
    %v468 = vld [vmem:[%s2 + $0x1c] sm:$0xf]
    %v469 = vld [vmem:[%s2 + $0x20] sm:$0xf]
    %v470 = vld [vmem:[%s2 + $0x24] sm:$0xf]
    %v471 = vld [vmem:[%s2 + $0x28] sm:$0xf]
    %v472 = vld [vmem:[%s2 + $0x2c] sm:$0xf]
    %v473 = vld [vmem:[%s2 + $0x30] sm:$0xf]
    %v474 = vld [vmem:[%s2 + $0x34] sm:$0xf]
    %v475 = vld [vmem:[%s2 + $0x38] sm:$0xf]
    %v476 = vld [vmem:[%s2 + $0x3c] sm:$0xf]
    %v477 = vpack.c.bf16 %v43, %v43
    %v478 = vpack.c.bf16 %v44, %v44
    %v479 = vld [vmem:[%s3] sm:$0xf]
    %v480 = vld [vmem:[%s3 + $0x4] sm:$0xf]
    %v481 = vld [vmem:[%s3 + $0x8] sm:$0xf]
    %v482 = vld [vmem:[%s3 + $0xc] sm:$0xf]
    %v483 = vld [vmem:[%s3 + $0x10] sm:$0xf]
    %v484 = vld [vmem:[%s3 + $0x14] sm:$0xf]
    %v485 = vld [vmem:[%s3 + $0x18] sm:$0xf]
    %v486 = vld [vmem:[%s3 + $0x1c] sm:$0xf]
    %v487 = vld [vmem:[%s3 + $0x20] sm:$0xf]
    %v488 = vld [vmem:[%s3 + $0x24] sm:$0xf]
    %v489 = vld [vmem:[%s3 + $0x28] sm:$0xf]
    %v490 = vld [vmem:[%s3 + $0x2c] sm:$0xf]
    %v491 = vld [vmem:[%s3 + $0x30] sm:$0xf]
    %v492 = vld [vmem:[%s3 + $0x34] sm:$0xf]
    %v493 = vld [vmem:[%s3 + $0x38] sm:$0xf]
    %v494 = vld [vmem:[%s3 + $0x3c] sm:$0xf]
    %v495 = vpack.c.bf16 %v150, %v150
    %v496 = vpack.c.bf16 %v254, %v254
    %v513 = vunpack.c.l.b16 %v479
    %v514 = vunpack.c.l.b16 %v480
    %v515 = vunpack.c.l.b16 %v481
    %v516 = vunpack.c.l.b16 %v482
    %v517 = vunpack.c.l.b16 %v483
    %v518 = vunpack.c.l.b16 %v484
    %v519 = vunpack.c.l.b16 %v485
    %v520 = vunpack.c.l.b16 %v486
    %v521 = vunpack.c.l.b16 %v487
    %v522 = vunpack.c.l.b16 %v488
    %v523 = vunpack.c.l.b16 %v489
    %v524 = vunpack.c.l.b16 %v490
    %v525 = vunpack.c.l.b16 %v491
    %v526 = vunpack.c.l.b16 %v492
    %v527 = vunpack.c.l.b16 %v493
    %v528 = vunpack.c.l.b16 %v494
    %v529 = vpack.c.b16 %v514, %v513
    %v530 = vpack.c.b16 %v516, %v515
    %v531 = vpack.c.b16 %v518, %v517
    %v532 = vpack.c.b16 %v520, %v519
    %v533 = vpack.c.b16 %v522, %v521
    %v534 = vpack.c.b16 %v524, %v523
    %v535 = vpack.c.b16 %v526, %v525
    %v536 = vpack.c.b16 %v528, %v527
    %vm537 = vcmask 64512
    %v539 = vsel %vm537, %v529, 0
    %v542 = vsel %vm537, %v530, 0
    %v545 = vsel %vm537, %v531, 0
    %v548 = vsel %vm537, %v532, 0
    %v551 = vsel %vm537, %v533, 0
    %v554 = vsel %vm537, %v534, 0
    %v557 = vsel %vm537, %v535, 0
    %v560 = vsel %vm537, %v536, 0
    %vm562 = vcmask 1043456
    %v564 = vsel %vm562, %v495, 0
    %v567 = vsel %vm562, %v496, 0
    %569 = vmatprep.subr.bf16.mxu0 %v567
    %570 = vmatpush1.bf16.msra.mxu0 %v564
    %571 = vmatprep.subr.bf16.mxu0 0
    %572 = vmatpush1.bf16.msra.mxu0 0
    %573 = vmatprep.subr.bf16.mxu0 0
    %574 = vmatpush1.bf16.msra.mxu0 0
    %575 = vmatprep.subr.bf16.mxu0 0
    %576 = vmatpush1.bf16.msra.mxu0 0
    %577 = vmatprep.subr.bf16.mxu0 0
    %578 = vmatpush1.bf16.msra.mxu0 0
    %579 = vmatprep.subr.bf16.mxu0 0
    %580 = vmatpush1.bf16.msra.mxu0 0
    %581 = vmatprep.subr.bf16.mxu0 0
    %582 = vmatpush1.bf16.msra.mxu0 0
    %583 = vmatprep.subr.bf16.mxu0 0
    %584 = vmatpush1.bf16.msra.mxu0 0
    %585 = vmatprep.subr.bf16.mxu0 0
    %586 = vmatpush1.bf16.msra.mxu0 0
    %587 = vmatprep.subr.bf16.mxu0 0
    %588 = vmatpush1.bf16.msra.mxu0 0
    %589 = vmatprep.subr.bf16.mxu0 0
    %590 = vmatpush1.bf16.msra.mxu0 0
    %591 = vmatprep.subr.bf16.mxu0 0
    %592 = vmatpush1.bf16.msra.mxu0 0
    %593 = vmatprep.subr.bf16.mxu0 0
    %594 = vmatpush1.bf16.msra.mxu0 0
    %595 = vmatprep.subr.bf16.mxu0 0
    %596 = vmatpush1.bf16.msra.mxu0 0
    %597 = vmatprep.subr.bf16.mxu0 0
    %598 = vmatpush1.bf16.msra.mxu0 0
    %599 = vmatprep.subr.bf16.mxu0 0
    %600 = vmatpush1.bf16.msra.mxu0 0
    %601 = vmatprep.mubr.bf16.mxu0 0
    %602 = vmatmul.mubr.bf16.gmra.mrb[0].mxu0 %v539
    %v603 = vpop.f32.mrb[0].mxu0
    %v604 = vadd.f32 0.0, %v603
    %v605 = vpop.f32.mrb[0].mxu0
    %v606 = vadd.f32 0.0, %v605
    %v607 = vpop.f32.mrb[0].mxu0
    %v608 = vadd.f32 0.0, %v607
    %v609 = vpop.f32.mrb[0].mxu0
    %v610 = vadd.f32 0.0, %v609
    %611 = vmatprep.mubr.bf16.mxu0 0
    %612 = vmatmul.mubr.bf16.gmra.mrb[0].mxu0 %v542
    %v613 = vpop.f32.mrb[0].mxu0
    %v614 = vadd.f32 0.0, %v613
    %v615 = vpop.f32.mrb[0].mxu0
    %v616 = vadd.f32 0.0, %v615
    %v617 = vpop.f32.mrb[0].mxu0
    %v618 = vadd.f32 0.0, %v617
    %v619 = vpop.f32.mrb[0].mxu0
    %v620 = vadd.f32 0.0, %v619
    %621 = vmatprep.mubr.bf16.mxu0 0
    %622 = vmatmul.mubr.bf16.gmra.mrb[0].mxu0 %v545
    %v623 = vpop.f32.mrb[0].mxu0
    %v624 = vadd.f32 0.0, %v623
    %v625 = vpop.f32.mrb[0].mxu0
    %v626 = vadd.f32 0.0, %v625
    %v627 = vpop.f32.mrb[0].mxu0
    %v628 = vadd.f32 0.0, %v627
    %v629 = vpop.f32.mrb[0].mxu0
    %v630 = vadd.f32 0.0, %v629
    %631 = vmatprep.mubr.bf16.mxu0 0
    %632 = vmatmul.mubr.bf16.gmra.mrb[0].mxu0 %v548
    %v633 = vpop.f32.mrb[0].mxu0
    %v634 = vadd.f32 0.0, %v633
    %v635 = vpop.f32.mrb[0].mxu0
    %v636 = vadd.f32 0.0, %v635
    %v637 = vpop.f32.mrb[0].mxu0
    %v638 = vadd.f32 0.0, %v637
    %v639 = vpop.f32.mrb[0].mxu0
    %v640 = vadd.f32 0.0, %v639
    %641 = vmatprep.mubr.bf16.mxu0 0
    %642 = vmatmul.mubr.bf16.gmra.mrb[0].mxu0 %v551
    %v643 = vpop.f32.mrb[0].mxu0
    %v644 = vadd.f32 0.0, %v643
    %v645 = vpop.f32.mrb[0].mxu0
    %v646 = vadd.f32 0.0, %v645
    %v647 = vpop.f32.mrb[0].mxu0
    %v648 = vadd.f32 0.0, %v647
    %v649 = vpop.f32.mrb[0].mxu0
    %v650 = vadd.f32 0.0, %v649
    %651 = vmatprep.mubr.bf16.mxu0 0
    %652 = vmatmul.mubr.bf16.gmra.mrb[0].mxu0 %v554
    %v653 = vpop.f32.mrb[0].mxu0
    %v654 = vadd.f32 0.0, %v653
    %v655 = vpop.f32.mrb[0].mxu0
    %v656 = vadd.f32 0.0, %v655
    %v657 = vpop.f32.mrb[0].mxu0
    %v658 = vadd.f32 0.0, %v657
    %v659 = vpop.f32.mrb[0].mxu0
    %v660 = vadd.f32 0.0, %v659
    %661 = vmatprep.mubr.bf16.mxu0 0
    %662 = vmatmul.mubr.bf16.gmra.mrb[0].mxu0 %v557
    %v663 = vpop.f32.mrb[0].mxu0
    %v664 = vadd.f32 0.0, %v663
    %v665 = vpop.f32.mrb[0].mxu0
    %v666 = vadd.f32 0.0, %v665
    %v667 = vpop.f32.mrb[0].mxu0
    %v668 = vadd.f32 0.0, %v667
    %v669 = vpop.f32.mrb[0].mxu0
    %v670 = vadd.f32 0.0, %v669
    %671 = vmatprep.mubr.bf16.mxu0 0
    %672 = vmatmul.mubr.bf16.gmra.mrb[0].mxu0 %v560
    %v673 = vpop.f32.mrb[0].mxu0
    %v674 = vadd.f32 0.0, %v673
    %v675 = vpop.f32.mrb[0].mxu0
    %v676 = vadd.f32 0.0, %v675
    %v677 = vpop.f32.mrb[0].mxu0
    %v678 = vadd.f32 0.0, %v677
    %v679 = vpop.f32.mrb[0].mxu0
    %v680 = vadd.f32 0.0, %v679
    %681 = vdwg.mxu0
    %v698 = vunpack.c.l.b16 %v461
    %v699 = vunpack.c.l.b16 %v462
    %v700 = vunpack.c.l.b16 %v463
    %v701 = vunpack.c.l.b16 %v464
    %v702 = vunpack.c.l.b16 %v465
    %v703 = vunpack.c.l.b16 %v466
    %v704 = vunpack.c.l.b16 %v467
    %v705 = vunpack.c.l.b16 %v468
    %v706 = vunpack.c.l.b16 %v469
    %v707 = vunpack.c.l.b16 %v470
    %v708 = vunpack.c.l.b16 %v471
    %v709 = vunpack.c.l.b16 %v472
    %v710 = vunpack.c.l.b16 %v473
    %v711 = vunpack.c.l.b16 %v474
    %v712 = vunpack.c.l.b16 %v475
    %v713 = vunpack.c.l.b16 %v476
    %v714 = vpack.c.b16 %v699, %v698
    %v715 = vpack.c.b16 %v701, %v700
    %v716 = vpack.c.b16 %v703, %v702
    %v717 = vpack.c.b16 %v705, %v704
    %v718 = vpack.c.b16 %v707, %v706
    %v719 = vpack.c.b16 %v709, %v708
    %v720 = vpack.c.b16 %v711, %v710
    %v721 = vpack.c.b16 %v713, %v712
    %v723 = vsel %vm537, %v714, 0
    %v726 = vsel %vm537, %v715, 0
    %v729 = vsel %vm537, %v716, 0
    %v732 = vsel %vm537, %v717, 0
    %v735 = vsel %vm537, %v718, 0
    %v738 = vsel %vm537, %v719, 0
    %v741 = vsel %vm537, %v720, 0
    %v744 = vsel %vm537, %v721, 0
    %v747 = vsel %vm562, %v477, 0
    %v750 = vsel %vm562, %v478, 0
    %752 = vmatprep.subr.bf16.mxu0 %v750
    %753 = vmatpush1.bf16.msra.mxu0 %v747
    %754 = vmatprep.subr.bf16.mxu0 0
    %755 = vmatpush1.bf16.msra.mxu0 0
    %756 = vmatprep.subr.bf16.mxu0 0
    %757 = vmatpush1.bf16.msra.mxu0 0
    %758 = vmatprep.subr.bf16.mxu0 0
    %759 = vmatpush1.bf16.msra.mxu0 0
    %760 = vmatprep.subr.bf16.mxu0 0
    %761 = vmatpush1.bf16.msra.mxu0 0
    %762 = vmatprep.subr.bf16.mxu0 0
    %763 = vmatpush1.bf16.msra.mxu0 0
    %764 = vmatprep.subr.bf16.mxu0 0
    %765 = vmatpush1.bf16.msra.mxu0 0
    %766 = vmatprep.subr.bf16.mxu0 0
    %767 = vmatpush1.bf16.msra.mxu0 0
    %768 = vmatprep.subr.bf16.mxu0 0
    %769 = vmatpush1.bf16.msra.mxu0 0
    %770 = vmatprep.subr.bf16.mxu0 0
    %771 = vmatpush1.bf16.msra.mxu0 0
    %772 = vmatprep.subr.bf16.mxu0 0
    %773 = vmatpush1.bf16.msra.mxu0 0
    %774 = vmatprep.subr.bf16.mxu0 0
    %775 = vmatpush1.bf16.msra.mxu0 0
    %776 = vmatprep.subr.bf16.mxu0 0
    %777 = vmatpush1.bf16.msra.mxu0 0
    %778 = vmatprep.subr.bf16.mxu0 0
    %779 = vmatpush1.bf16.msra.mxu0 0
    %780 = vmatprep.subr.bf16.mxu0 0
    %781 = vmatpush1.bf16.msra.mxu0 0
    %782 = vmatprep.subr.bf16.mxu0 0
    %783 = vmatpush1.bf16.msra.mxu0 0
    %784 = vmatprep.mubr.bf16.mxu0 0
    %785 = vmatmul.mubr.bf16.gmra.mrb[0].mxu0 %v723
    %v786 = vpop.f32.mrb[0].mxu0
    %v787 = vadd.f32 %v604, %v786
    %v788 = vpop.f32.mrb[0].mxu0
    %v789 = vadd.f32 %v606, %v788
    %v790 = vpop.f32.mrb[0].mxu0
    %v791 = vadd.f32 %v608, %v790
    %v792 = vpop.f32.mrb[0].mxu0
    %v793 = vadd.f32 %v610, %v792
    %794 = vmatprep.mubr.bf16.mxu0 0
    %795 = vmatmul.mubr.bf16.gmra.mrb[0].mxu0 %v726
    %v796 = vpop.f32.mrb[0].mxu0
    %v797 = vadd.f32 %v614, %v796
    %v798 = vpop.f32.mrb[0].mxu0
    %v799 = vadd.f32 %v616, %v798
    %v800 = vpop.f32.mrb[0].mxu0
    %v801 = vadd.f32 %v618, %v800
    %v802 = vpop.f32.mrb[0].mxu0
    %v803 = vadd.f32 %v620, %v802
    %804 = vmatprep.mubr.bf16.mxu0 0
    %805 = vmatmul.mubr.bf16.gmra.mrb[0].mxu0 %v729
    %v806 = vpop.f32.mrb[0].mxu0
    %v807 = vadd.f32 %v624, %v806
    %v808 = vpop.f32.mrb[0].mxu0
    %v809 = vadd.f32 %v626, %v808
    %v810 = vpop.f32.mrb[0].mxu0
    %v811 = vadd.f32 %v628, %v810
    %v812 = vpop.f32.mrb[0].mxu0
    %v813 = vadd.f32 %v630, %v812
    %814 = vmatprep.mubr.bf16.mxu0 0
    %815 = vmatmul.mubr.bf16.gmra.mrb[0].mxu0 %v732
    %v816 = vpop.f32.mrb[0].mxu0
    %v817 = vadd.f32 %v634, %v816
    %v818 = vpop.f32.mrb[0].mxu0
    %v819 = vadd.f32 %v636, %v818
    %v820 = vpop.f32.mrb[0].mxu0
    %v821 = vadd.f32 %v638, %v820
    %v822 = vpop.f32.mrb[0].mxu0
    %v823 = vadd.f32 %v640, %v822
    %824 = vmatprep.mubr.bf16.mxu0 0
    %825 = vmatmul.mubr.bf16.gmra.mrb[0].mxu0 %v735
    %v826 = vpop.f32.mrb[0].mxu0
    %v827 = vadd.f32 %v644, %v826
    %v828 = vpop.f32.mrb[0].mxu0
    %v829 = vadd.f32 %v646, %v828
    %v830 = vpop.f32.mrb[0].mxu0
    %v831 = vadd.f32 %v648, %v830
    %v832 = vpop.f32.mrb[0].mxu0
    %v833 = vadd.f32 %v650, %v832
    %834 = vmatprep.mubr.bf16.mxu0 0
    %835 = vmatmul.mubr.bf16.gmra.mrb[0].mxu0 %v738
    %v836 = vpop.f32.mrb[0].mxu0
    %v837 = vadd.f32 %v654, %v836
    %v838 = vpop.f32.mrb[0].mxu0
    %v839 = vadd.f32 %v656, %v838
    %v840 = vpop.f32.mrb[0].mxu0
    %v841 = vadd.f32 %v658, %v840
    %v842 = vpop.f32.mrb[0].mxu0
    %v843 = vadd.f32 %v660, %v842
    %844 = vmatprep.mubr.bf16.mxu0 0
    %845 = vmatmul.mubr.bf16.gmra.mrb[0].mxu0 %v741
    %v846 = vpop.f32.mrb[0].mxu0
    %v847 = vadd.f32 %v664, %v846
    %v848 = vpop.f32.mrb[0].mxu0
    %v849 = vadd.f32 %v666, %v848
    %v850 = vpop.f32.mrb[0].mxu0
    %v851 = vadd.f32 %v668, %v850
    %v852 = vpop.f32.mrb[0].mxu0
    %v853 = vadd.f32 %v670, %v852
    %854 = vmatprep.mubr.bf16.mxu0 0
    %855 = vmatmul.mubr.bf16.gmra.mrb[0].mxu0 %v744
    %v856 = vpop.f32.mrb[0].mxu0
    %v857 = vadd.f32 %v674, %v856
    %v858 = vpop.f32.mrb[0].mxu0
    %v859 = vadd.f32 %v676, %v858
    %v860 = vpop.f32.mrb[0].mxu0
    %v861 = vadd.f32 %v678, %v860
    %v862 = vpop.f32.mrb[0].mxu0
    %v863 = vadd.f32 %v680, %v862
    %864 = vdwg.mxu0
    %v865 = vld [vmem:[%s4] sm:$0xf]
    %v866 = vld [vmem:[%s4 + $0x4] sm:$0xf]
    %v867 = vld [vmem:[%s4 + $0x8] sm:$0xf]
    %v868 = vld [vmem:[%s4 + $0xc] sm:$0xf]
    %v869 = vld [vmem:[%s4 + $0x10] sm:$0xf]
    %v870 = vld [vmem:[%s4 + $0x14] sm:$0xf]
    %v871 = vld [vmem:[%s4 + $0x18] sm:$0xf]
    %v872 = vld [vmem:[%s4 + $0x1c] sm:$0xf]
    %v873 = vld [vmem:[%s4 + $0x20] sm:$0xf]
    %v874 = vld [vmem:[%s4 + $0x24] sm:$0xf]
    %v875 = vld [vmem:[%s4 + $0x28] sm:$0xf]
    %v876 = vld [vmem:[%s4 + $0x2c] sm:$0xf]
    %v877 = vld [vmem:[%s4 + $0x30] sm:$0xf]
    %v878 = vld [vmem:[%s4 + $0x34] sm:$0xf]
    %v879 = vld [vmem:[%s4 + $0x38] sm:$0xf]
    %v880 = vld [vmem:[%s4 + $0x3c] sm:$0xf]
    %v881 = vpack.c.bf16 %v357, %v357
    %v882 = vpack.c.bf16 %v460, %v460
    %v899 = vunpack.c.l.b16 %v865
    %v900 = vunpack.c.l.b16 %v866
    %v901 = vunpack.c.l.b16 %v867
    %v902 = vunpack.c.l.b16 %v868
    %v903 = vunpack.c.l.b16 %v869
    %v904 = vunpack.c.l.b16 %v870
    %v905 = vunpack.c.l.b16 %v871
    %v906 = vunpack.c.l.b16 %v872
    %v907 = vunpack.c.l.b16 %v873
    %v908 = vunpack.c.l.b16 %v874
    %v909 = vunpack.c.l.b16 %v875
    %v910 = vunpack.c.l.b16 %v876
    %v911 = vunpack.c.l.b16 %v877
    %v912 = vunpack.c.l.b16 %v878
    %v913 = vunpack.c.l.b16 %v879
    %v914 = vunpack.c.l.b16 %v880
    %v915 = vpack.c.b16 %v900, %v899
    %v916 = vpack.c.b16 %v902, %v901
    %v917 = vpack.c.b16 %v904, %v903
    %v918 = vpack.c.b16 %v906, %v905
    %v919 = vpack.c.b16 %v908, %v907
    %v920 = vpack.c.b16 %v910, %v909
    %v921 = vpack.c.b16 %v912, %v911
    %v922 = vpack.c.b16 %v914, %v913
    %v924 = vsel %vm537, %v915, 0
    %v927 = vsel %vm537, %v916, 0
    %v930 = vsel %vm537, %v917, 0
    %v933 = vsel %vm537, %v918, 0
    %v936 = vsel %vm537, %v919, 0
    %v939 = vsel %vm537, %v920, 0
    %v942 = vsel %vm537, %v921, 0
    %v945 = vsel %vm537, %v922, 0
    %v948 = vsel %vm562, %v881, 0
    %v951 = vsel %vm562, %v882, 0
    %953 = vmatprep.subr.bf16.mxu0 %v951
    %954 = vmatpush1.bf16.msra.mxu0 %v948
    %955 = vmatprep.subr.bf16.mxu0 0
    %956 = vmatpush1.bf16.msra.mxu0 0
    %957 = vmatprep.subr.bf16.mxu0 0
    %958 = vmatpush1.bf16.msra.mxu0 0
    %959 = vmatprep.subr.bf16.mxu0 0
    %960 = vmatpush1.bf16.msra.mxu0 0
    %961 = vmatprep.subr.bf16.mxu0 0
    %962 = vmatpush1.bf16.msra.mxu0 0
    %963 = vmatprep.subr.bf16.mxu0 0
    %964 = vmatpush1.bf16.msra.mxu0 0
    %965 = vmatprep.subr.bf16.mxu0 0
    %966 = vmatpush1.bf16.msra.mxu0 0
    %967 = vmatprep.subr.bf16.mxu0 0
    %968 = vmatpush1.bf16.msra.mxu0 0
    %969 = vmatprep.subr.bf16.mxu0 0
    %970 = vmatpush1.bf16.msra.mxu0 0
    %971 = vmatprep.subr.bf16.mxu0 0
    %972 = vmatpush1.bf16.msra.mxu0 0
    %973 = vmatprep.subr.bf16.mxu0 0
    %974 = vmatpush1.bf16.msra.mxu0 0
    %975 = vmatprep.subr.bf16.mxu0 0
    %976 = vmatpush1.bf16.msra.mxu0 0
    %977 = vmatprep.subr.bf16.mxu0 0
    %978 = vmatpush1.bf16.msra.mxu0 0
    %979 = vmatprep.subr.bf16.mxu0 0
    %980 = vmatpush1.bf16.msra.mxu0 0
    %981 = vmatprep.subr.bf16.mxu0 0
    %982 = vmatpush1.bf16.msra.mxu0 0
    %983 = vmatprep.subr.bf16.mxu0 0
    %984 = vmatpush1.bf16.msra.mxu0 0
    %985 = vmatprep.mubr.bf16.mxu0 0
    %986 = vmatmul.mubr.bf16.gmra.mrb[0].mxu0 %v924
    %v987 = vpop.f32.mrb[0].mxu0
    %v988 = vadd.f32 0.0, %v987
    %v989 = vpop.f32.mrb[0].mxu0
    %v990 = vadd.f32 0.0, %v989
    %v991 = vpop.f32.mrb[0].mxu0
    %v992 = vadd.f32 0.0, %v991
    %v993 = vpop.f32.mrb[0].mxu0
    %v994 = vadd.f32 0.0, %v993
    %995 = vmatprep.mubr.bf16.mxu0 0
    %996 = vmatmul.mubr.bf16.gmra.mrb[0].mxu0 %v927
    %v997 = vpop.f32.mrb[0].mxu0
    %v998 = vadd.f32 0.0, %v997
    %v999 = vpop.f32.mrb[0].mxu0
    %v1000 = vadd.f32 0.0, %v999
    %v1001 = vpop.f32.mrb[0].mxu0
    %v1002 = vadd.f32 0.0, %v1001
    %v1003 = vpop.f32.mrb[0].mxu0
    %v1004 = vadd.f32 0.0, %v1003
    %1005 = vmatprep.mubr.bf16.mxu0 0
    %1006 = vmatmul.mubr.bf16.gmra.mrb[0].mxu0 %v930
    %v1007 = vpop.f32.mrb[0].mxu0
    %v1008 = vadd.f32 0.0, %v1007
    %v1009 = vpop.f32.mrb[0].mxu0
    %v1010 = vadd.f32 0.0, %v1009
    %v1011 = vpop.f32.mrb[0].mxu0
    %v1012 = vadd.f32 0.0, %v1011
    %v1013 = vpop.f32.mrb[0].mxu0
    %v1014 = vadd.f32 0.0, %v1013
    %1015 = vmatprep.mubr.bf16.mxu0 0
    %1016 = vmatmul.mubr.bf16.gmra.mrb[0].mxu0 %v933
    %v1017 = vpop.f32.mrb[0].mxu0
    %v1018 = vadd.f32 0.0, %v1017
    %v1019 = vpop.f32.mrb[0].mxu0
    %v1020 = vadd.f32 0.0, %v1019
    %v1021 = vpop.f32.mrb[0].mxu0
    %v1022 = vadd.f32 0.0, %v1021
    %v1023 = vpop.f32.mrb[0].mxu0
    %v1024 = vadd.f32 0.0, %v1023
    %1025 = vmatprep.mubr.bf16.mxu0 0
    %1026 = vmatmul.mubr.bf16.gmra.mrb[0].mxu0 %v936
    %v1027 = vpop.f32.mrb[0].mxu0
    %v1028 = vadd.f32 0.0, %v1027
    %v1029 = vpop.f32.mrb[0].mxu0
    %v1030 = vadd.f32 0.0, %v1029
    %v1031 = vpop.f32.mrb[0].mxu0
    %v1032 = vadd.f32 0.0, %v1031
    %v1033 = vpop.f32.mrb[0].mxu0
    %v1034 = vadd.f32 0.0, %v1033
    %1035 = vmatprep.mubr.bf16.mxu0 0
    %1036 = vmatmul.mubr.bf16.gmra.mrb[0].mxu0 %v939
    %v1037 = vpop.f32.mrb[0].mxu0
    %v1038 = vadd.f32 0.0, %v1037
    %v1039 = vpop.f32.mrb[0].mxu0
    %v1040 = vadd.f32 0.0, %v1039
    %v1041 = vpop.f32.mrb[0].mxu0
    %v1042 = vadd.f32 0.0, %v1041
    %v1043 = vpop.f32.mrb[0].mxu0
    %v1044 = vadd.f32 0.0, %v1043
    %1045 = vmatprep.mubr.bf16.mxu0 0
    %1046 = vmatmul.mubr.bf16.gmra.mrb[0].mxu0 %v942
    %v1047 = vpop.f32.mrb[0].mxu0
    %v1048 = vadd.f32 0.0, %v1047
    %v1049 = vpop.f32.mrb[0].mxu0
    %v1050 = vadd.f32 0.0, %v1049
    %v1051 = vpop.f32.mrb[0].mxu0
    %v1052 = vadd.f32 0.0, %v1051
    %v1053 = vpop.f32.mrb[0].mxu0
    %v1054 = vadd.f32 0.0, %v1053
    %1055 = vmatprep.mubr.bf16.mxu0 0
    %1056 = vmatmul.mubr.bf16.gmra.mrb[0].mxu0 %v945
    %v1057 = vpop.f32.mrb[0].mxu0
    %v1058 = vadd.f32 0.0, %v1057
    %v1059 = vpop.f32.mrb[0].mxu0
    %v1060 = vadd.f32 0.0, %v1059
    %v1061 = vpop.f32.mrb[0].mxu0
    %v1062 = vadd.f32 0.0, %v1061
    %v1063 = vpop.f32.mrb[0].mxu0
    %v1064 = vadd.f32 0.0, %v1063
    %1065 = vdwg.mxu0
    %v1066 = vadd.f32 %v787, %v988
    %v1067 = vadd.f32 %v789, %v990
    %v1068 = vadd.f32 %v791, %v992
    %v1069 = vadd.f32 %v793, %v994
    %v1070 = vadd.f32 %v797, %v998
    %v1071 = vadd.f32 %v799, %v1000
    %v1072 = vadd.f32 %v801, %v1002
    %v1073 = vadd.f32 %v803, %v1004
    %v1074 = vadd.f32 %v807, %v1008
    %v1075 = vadd.f32 %v809, %v1010
    %v1076 = vadd.f32 %v811, %v1012
    %v1077 = vadd.f32 %v813, %v1014
    %v1078 = vadd.f32 %v817, %v1018
    %v1079 = vadd.f32 %v819, %v1020
    %v1080 = vadd.f32 %v821, %v1022
    %v1081 = vadd.f32 %v823, %v1024
    %v1082 = vadd.f32 %v827, %v1028
    %v1083 = vadd.f32 %v829, %v1030
    %v1084 = vadd.f32 %v831, %v1032
    %v1085 = vadd.f32 %v833, %v1034
    %v1086 = vadd.f32 %v837, %v1038
    %v1087 = vadd.f32 %v839, %v1040
    %v1088 = vadd.f32 %v841, %v1042
    %v1089 = vadd.f32 %v843, %v1044
    %v1090 = vadd.f32 %v847, %v1048
    %v1091 = vadd.f32 %v849, %v1050
    %v1092 = vadd.f32 %v851, %v1052
    %v1093 = vadd.f32 %v853, %v1054
    %v1094 = vadd.f32 %v857, %v1058
    %v1095 = vadd.f32 %v859, %v1060
    %v1096 = vadd.f32 %v861, %v1062
    %v1097 = vadd.f32 %v863, %v1064
    %v1098 = vld [vmem:[%s5] sm:$0xff]
    %v1099 = vld [vmem:[%s5 + $0x8] sm:$0xff]
    %v1100 = vld [vmem:[%s5 + $0x10] sm:$0xff]
    %v1101 = vld [vmem:[%s5 + $0x18] sm:$0xff]
    %v1102 = vld [vmem:[%s5 + $0x20] sm:$0xff]
    %v1103 = vld [vmem:[%s5 + $0x28] sm:$0xff]
    %v1104 = vld [vmem:[%s5 + $0x30] sm:$0xff]
    %v1105 = vld [vmem:[%s5 + $0x38] sm:$0xff]
    %v1106 = vld [vmem:[%s5 + $0x40] sm:$0xff]
    %v1107 = vld [vmem:[%s5 + $0x48] sm:$0xff]
    %v1108 = vld [vmem:[%s5 + $0x50] sm:$0xff]
    %v1109 = vld [vmem:[%s5 + $0x58] sm:$0xff]
    %v1110 = vld [vmem:[%s5 + $0x60] sm:$0xff]
    %v1111 = vld [vmem:[%s5 + $0x68] sm:$0xff]
    %v1112 = vld [vmem:[%s5 + $0x70] sm:$0xff]
    %v1113 = vld [vmem:[%s5 + $0x78] sm:$0xff]
    %1115 = vset.pattern.permute.xlu0 0
    %1116 = vperm.xlu0 %1115, %v1098
    %v1117 = vpop.permute.xlu0 %1116
    %1120 = vset.pattern.permute.xlu0 0
    %1121 = vperm.xlu0 %1120, %v1099
    %v1122 = vpop.permute.xlu0 %1121
    %1125 = vset.pattern.permute.xlu0 0
    %1126 = vperm.xlu0 %1125, %v1100
    %v1127 = vpop.permute.xlu0 %1126
    %1130 = vset.pattern.permute.xlu0 0
    %1131 = vperm.xlu0 %1130, %v1101
    %v1132 = vpop.permute.xlu0 %1131
    %1135 = vset.pattern.permute.xlu0 0
    %1136 = vperm.xlu0 %1135, %v1102
    %v1137 = vpop.permute.xlu0 %1136
    %1140 = vset.pattern.permute.xlu0 0
    %1141 = vperm.xlu0 %1140, %v1103
    %v1142 = vpop.permute.xlu0 %1141
    %1145 = vset.pattern.permute.xlu0 0
    %1146 = vperm.xlu0 %1145, %v1104
    %v1147 = vpop.permute.xlu0 %1146
    %1150 = vset.pattern.permute.xlu0 0
    %1151 = vperm.xlu0 %1150, %v1105
    %v1152 = vpop.permute.xlu0 %1151
    %1155 = vset.pattern.permute.xlu0 0
    %1156 = vperm.xlu0 %1155, %v1106
    %v1157 = vpop.permute.xlu0 %1156
    %1160 = vset.pattern.permute.xlu0 0
    %1161 = vperm.xlu0 %1160, %v1107
    %v1162 = vpop.permute.xlu0 %1161
    %1165 = vset.pattern.permute.xlu0 0
    %1166 = vperm.xlu0 %1165, %v1108
    %v1167 = vpop.permute.xlu0 %1166
    %1170 = vset.pattern.permute.xlu0 0
    %1171 = vperm.xlu0 %1170, %v1109
    %v1172 = vpop.permute.xlu0 %1171
    %1175 = vset.pattern.permute.xlu0 0
    %1176 = vperm.xlu0 %1175, %v1110
    %v1177 = vpop.permute.xlu0 %1176
    %1180 = vset.pattern.permute.xlu0 0
    %1181 = vperm.xlu0 %1180, %v1111
    %v1182 = vpop.permute.xlu0 %1181
    %1185 = vset.pattern.permute.xlu0 0
    %1186 = vperm.xlu0 %1185, %v1112
    %v1187 = vpop.permute.xlu0 %1186
    %1190 = vset.pattern.permute.xlu0 0
    %1191 = vperm.xlu0 %1190, %v1113
    %v1192 = vpop.permute.xlu0 %1191
    %v1194 = vadd.f32 %v1066, %v1117
    %v1195 = vadd.f32 %v1067, %v1117
    %v1196 = vadd.f32 %v1068, %v1122
    %v1197 = vadd.f32 %v1069, %v1122
    %v1198 = vadd.f32 %v1070, %v1127
    %v1199 = vadd.f32 %v1071, %v1127
    %v1200 = vadd.f32 %v1072, %v1132
    %v1201 = vadd.f32 %v1073, %v1132
    %v1202 = vadd.f32 %v1074, %v1137
    %v1203 = vadd.f32 %v1075, %v1137
    %v1204 = vadd.f32 %v1076, %v1142
    %v1205 = vadd.f32 %v1077, %v1142
    %v1206 = vadd.f32 %v1078, %v1147
    %v1207 = vadd.f32 %v1079, %v1147
    %v1208 = vadd.f32 %v1080, %v1152
    %v1209 = vadd.f32 %v1081, %v1152
    %v1210 = vadd.f32 %v1082, %v1157
    %v1211 = vadd.f32 %v1083, %v1157
    %v1212 = vadd.f32 %v1084, %v1162
    %v1213 = vadd.f32 %v1085, %v1162
    %v1214 = vadd.f32 %v1086, %v1167
    %v1215 = vadd.f32 %v1087, %v1167
    %v1216 = vadd.f32 %v1088, %v1172
    %v1217 = vadd.f32 %v1089, %v1172
    %v1218 = vadd.f32 %v1090, %v1177
    %v1219 = vadd.f32 %v1091, %v1177
    %v1220 = vadd.f32 %v1092, %v1182
    %v1221 = vadd.f32 %v1093, %v1182
    %v1222 = vadd.f32 %v1094, %v1187
    %v1223 = vadd.f32 %v1095, %v1187
    %v1224 = vadd.f32 %v1096, %v1192
    %v1225 = vadd.f32 %v1097, %v1192
    %v1226 = vmax.f32 %v1194, 0.0
    %v1227 = vmax.f32 %v1195, 0.0
    %v1228 = vmax.f32 %v1196, 0.0
    %v1229 = vmax.f32 %v1197, 0.0
    %v1230 = vmax.f32 %v1198, 0.0
    %v1231 = vmax.f32 %v1199, 0.0
    %v1232 = vmax.f32 %v1200, 0.0
    %v1233 = vmax.f32 %v1201, 0.0
    %v1234 = vmax.f32 %v1202, 0.0
    %v1235 = vmax.f32 %v1203, 0.0
    %v1236 = vmax.f32 %v1204, 0.0
    %v1237 = vmax.f32 %v1205, 0.0
    %v1238 = vmax.f32 %v1206, 0.0
    %v1239 = vmax.f32 %v1207, 0.0
    %v1240 = vmax.f32 %v1208, 0.0
    %v1241 = vmax.f32 %v1209, 0.0
    %v1242 = vmax.f32 %v1210, 0.0
    %v1243 = vmax.f32 %v1211, 0.0
    %v1244 = vmax.f32 %v1212, 0.0
    %v1245 = vmax.f32 %v1213, 0.0
    %v1246 = vmax.f32 %v1214, 0.0
    %v1247 = vmax.f32 %v1215, 0.0
    %v1248 = vmax.f32 %v1216, 0.0
    %v1249 = vmax.f32 %v1217, 0.0
    %v1250 = vmax.f32 %v1218, 0.0
    %v1251 = vmax.f32 %v1219, 0.0
    %v1252 = vmax.f32 %v1220, 0.0
    %v1253 = vmax.f32 %v1221, 0.0
    %v1254 = vmax.f32 %v1222, 0.0
    %v1255 = vmax.f32 %v1223, 0.0
    %v1256 = vmax.f32 %v1224, 0.0
    %v1257 = vmax.f32 %v1225, 0.0
    %v1258 = vld [vmem:[%s6] sm:$0xf]
    %v1259 = vld [vmem:[%s6 + $0x4] sm:$0xf]
    %v1260 = vld [vmem:[%s6 + $0x8] sm:$0xf]
    %v1261 = vld [vmem:[%s6 + $0xc] sm:$0xf]
    %v1262 = vld [vmem:[%s6 + $0x10] sm:$0xf]
    %v1263 = vld [vmem:[%s6 + $0x14] sm:$0xf]
    %v1264 = vld [vmem:[%s6 + $0x18] sm:$0xf]
    %v1265 = vld [vmem:[%s6 + $0x1c] sm:$0xf]
    %v1266 = vld [vmem:[%s6 + $0x20] sm:$0xf]
    %v1267 = vld [vmem:[%s6 + $0x24] sm:$0xf]
    %v1268 = vld [vmem:[%s6 + $0x28] sm:$0xf]
    %v1269 = vld [vmem:[%s6 + $0x2c] sm:$0xf]
    %v1270 = vld [vmem:[%s6 + $0x30] sm:$0xf]
    %v1271 = vld [vmem:[%s6 + $0x34] sm:$0xf]
    %v1272 = vld [vmem:[%s6 + $0x38] sm:$0xf]
    %v1273 = vld [vmem:[%s6 + $0x3c] sm:$0xf]
    %v1274 = vpack.c.bf16 %v1228, %v1226
    %v1275 = vpack.c.bf16 %v1229, %v1227
    %v1276 = vpack.c.bf16 %v1232, %v1230
    %v1277 = vpack.c.bf16 %v1233, %v1231
    %v1278 = vpack.c.bf16 %v1236, %v1234
    %v1279 = vpack.c.bf16 %v1237, %v1235
    %v1280 = vpack.c.bf16 %v1240, %v1238
    %v1281 = vpack.c.bf16 %v1241, %v1239
    %v1282 = vpack.c.bf16 %v1244, %v1242
    %v1283 = vpack.c.bf16 %v1245, %v1243
    %v1284 = vpack.c.bf16 %v1248, %v1246
    %v1285 = vpack.c.bf16 %v1249, %v1247
    %v1286 = vpack.c.bf16 %v1252, %v1250
    %v1287 = vpack.c.bf16 %v1253, %v1251
    %v1288 = vpack.c.bf16 %v1256, %v1254
    %v1289 = vpack.c.bf16 %v1257, %v1255
    %v1290 = vld [vmem:[%s7] sm:$0xff]
    %v1291 = vld [vmem:[%s7 + $0x8] sm:$0xff]
    %v1292 = vld [vmem:[%s7 + $0x10] sm:$0xff]
    %v1293 = vld [vmem:[%s7 + $0x18] sm:$0xff]
    %v1294 = vld [vmem:[%s7 + $0x20] sm:$0xff]
    %v1295 = vld [vmem:[%s7 + $0x28] sm:$0xff]
    %v1296 = vld [vmem:[%s7 + $0x30] sm:$0xff]
    %v1297 = vld [vmem:[%s7 + $0x38] sm:$0xff]
    %v1298 = vld [vmem:[%s7 + $0x40] sm:$0xff]
    %v1299 = vld [vmem:[%s7 + $0x48] sm:$0xff]
    %v1300 = vld [vmem:[%s7 + $0x50] sm:$0xff]
    %v1301 = vld [vmem:[%s7 + $0x58] sm:$0xff]
    %v1302 = vld [vmem:[%s7 + $0x60] sm:$0xff]
    %v1303 = vld [vmem:[%s7 + $0x68] sm:$0xff]
    %v1304 = vld [vmem:[%s7 + $0x70] sm:$0xff]
    %v1305 = vld [vmem:[%s7 + $0x78] sm:$0xff]
    %1307 = vset.pattern.permute.xlu0 0
    %1308 = vperm.xlu0 %1307, %v1290
    %v1309 = vpop.permute.xlu0 %1308
    %1312 = vset.pattern.permute.xlu0 0
    %1313 = vperm.xlu0 %1312, %v1291
    %v1314 = vpop.permute.xlu0 %1313
    %1317 = vset.pattern.permute.xlu0 0
    %1318 = vperm.xlu0 %1317, %v1292
    %v1319 = vpop.permute.xlu0 %1318
    %1322 = vset.pattern.permute.xlu0 0
    %1323 = vperm.xlu0 %1322, %v1293
    %v1324 = vpop.permute.xlu0 %1323
    %1327 = vset.pattern.permute.xlu0 0
    %1328 = vperm.xlu0 %1327, %v1294
    %v1329 = vpop.permute.xlu0 %1328
    %1332 = vset.pattern.permute.xlu0 0
    %1333 = vperm.xlu0 %1332, %v1295
    %v1334 = vpop.permute.xlu0 %1333
    %1337 = vset.pattern.permute.xlu0 0
    %1338 = vperm.xlu0 %1337, %v1296
    %v1339 = vpop.permute.xlu0 %1338
    %1342 = vset.pattern.permute.xlu0 0
    %1343 = vperm.xlu0 %1342, %v1297
    %v1344 = vpop.permute.xlu0 %1343
    %1347 = vset.pattern.permute.xlu0 0
    %1348 = vperm.xlu0 %1347, %v1298
    %v1349 = vpop.permute.xlu0 %1348
    %1352 = vset.pattern.permute.xlu0 0
    %1353 = vperm.xlu0 %1352, %v1299
    %v1354 = vpop.permute.xlu0 %1353
    %1357 = vset.pattern.permute.xlu0 0
    %1358 = vperm.xlu0 %1357, %v1300
    %v1359 = vpop.permute.xlu0 %1358
    %1362 = vset.pattern.permute.xlu0 0
    %1363 = vperm.xlu0 %1362, %v1301
    %v1364 = vpop.permute.xlu0 %1363
    %1367 = vset.pattern.permute.xlu0 0
    %1368 = vperm.xlu0 %1367, %v1302
    %v1369 = vpop.permute.xlu0 %1368
    %1372 = vset.pattern.permute.xlu0 0
    %1373 = vperm.xlu0 %1372, %v1303
    %v1374 = vpop.permute.xlu0 %1373
    %1377 = vset.pattern.permute.xlu0 0
    %1378 = vperm.xlu0 %1377, %v1304
    %v1379 = vpop.permute.xlu0 %1378
    %1382 = vset.pattern.permute.xlu0 0
    %1383 = vperm.xlu0 %1382, %v1305
    %v1384 = vpop.permute.xlu0 %1383
    %v1402 = vunpack.c.l.b16 %v1258
    %v1403 = vunpack.c.l.b16 %v1259
    %v1404 = vunpack.c.l.b16 %v1260
    %v1405 = vunpack.c.l.b16 %v1261
    %v1406 = vunpack.c.l.b16 %v1262
    %v1407 = vunpack.c.l.b16 %v1263
    %v1408 = vunpack.c.l.b16 %v1264
    %v1409 = vunpack.c.l.b16 %v1265
    %v1410 = vunpack.c.l.b16 %v1266
    %v1411 = vunpack.c.l.b16 %v1267
    %v1412 = vunpack.c.l.b16 %v1268
    %v1413 = vunpack.c.l.b16 %v1269
    %v1414 = vunpack.c.l.b16 %v1270
    %v1415 = vunpack.c.l.b16 %v1271
    %v1416 = vunpack.c.l.b16 %v1272
    %v1417 = vunpack.c.l.b16 %v1273
    %v1418 = vpack.c.b16 %v1403, %v1402
    %v1419 = vpack.c.b16 %v1405, %v1404
    %v1420 = vpack.c.b16 %v1407, %v1406
    %v1421 = vpack.c.b16 %v1409, %v1408
    %v1422 = vpack.c.b16 %v1411, %v1410
    %v1423 = vpack.c.b16 %v1413, %v1412
    %v1424 = vpack.c.b16 %v1415, %v1414
    %v1425 = vpack.c.b16 %v1417, %v1416
    %1434 = vmatprep.subr.bf16.mxu0 %v1275
    %1435 = vmatpush1.bf16.msra.mxu0 %v1274
    %1436 = vmatprep.subr.bf16.mxu0 %v1277
    %1437 = vmatpush1.bf16.msra.mxu0 %v1276
    %1438 = vmatprep.subr.bf16.mxu0 %v1279
    %1439 = vmatpush1.bf16.msra.mxu0 %v1278
    %1440 = vmatprep.subr.bf16.mxu0 %v1281
    %1441 = vmatpush1.bf16.msra.mxu0 %v1280
    %1442 = vmatprep.subr.bf16.mxu0 %v1283
    %1443 = vmatpush1.bf16.msra.mxu0 %v1282
    %1444 = vmatprep.subr.bf16.mxu0 %v1285
    %1445 = vmatpush1.bf16.msra.mxu0 %v1284
    %1446 = vmatprep.subr.bf16.mxu0 %v1287
    %1447 = vmatpush1.bf16.msra.mxu0 %v1286
    %1448 = vmatprep.subr.bf16.mxu0 %v1289
    %1449 = vmatpush1.bf16.msra.mxu0 %v1288
    %1450 = vmatprep.subr.bf16.mxu0 0
    %1451 = vmatpush1.bf16.msra.mxu0 0
    %1452 = vmatprep.subr.bf16.mxu0 0
    %1453 = vmatpush1.bf16.msra.mxu0 0
    %1454 = vmatprep.subr.bf16.mxu0 0
    %1455 = vmatpush1.bf16.msra.mxu0 0
    %1456 = vmatprep.subr.bf16.mxu0 0
    %1457 = vmatpush1.bf16.msra.mxu0 0
    %1458 = vmatprep.subr.bf16.mxu0 0
    %1459 = vmatpush1.bf16.msra.mxu0 0
    %1460 = vmatprep.subr.bf16.mxu0 0
    %1461 = vmatpush1.bf16.msra.mxu0 0
    %1462 = vmatprep.subr.bf16.mxu0 0
    %1463 = vmatpush1.bf16.msra.mxu0 0
    %1464 = vmatprep.subr.bf16.mxu0 0
    %1465 = vmatpush1.bf16.msra.mxu0 0
    %1466 = vmatprep.mubr.bf16.mxu0 0
    %1467 = vmatmul.mubr.bf16.gmra.mrb[0].mxu0 %v1418
    %v1468 = vpop.f32.mrb[0].mxu0
    %v1469 = vadd.f32 %v1309, %v1468
    %v1470 = vpop.f32.mrb[0].mxu0
    %v1471 = vadd.f32 %v1309, %v1470
    %v1472 = vpop.f32.mrb[0].mxu0
    %v1473 = vadd.f32 %v1314, %v1472
    %v1474 = vpop.f32.mrb[0].mxu0
    %v1475 = vadd.f32 %v1314, %v1474
    %1476 = vmatprep.mubr.bf16.mxu0 0
    %1477 = vmatmul.mubr.bf16.gmra.mrb[0].mxu0 %v1419
    %v1478 = vpop.f32.mrb[0].mxu0
    %v1479 = vadd.f32 %v1319, %v1478
    %v1480 = vpop.f32.mrb[0].mxu0
    %v1481 = vadd.f32 %v1319, %v1480
    %v1482 = vpop.f32.mrb[0].mxu0
    %v1483 = vadd.f32 %v1324, %v1482
    %v1484 = vpop.f32.mrb[0].mxu0
    %v1485 = vadd.f32 %v1324, %v1484
    %1486 = vmatprep.mubr.bf16.mxu0 0
    %1487 = vmatmul.mubr.bf16.gmra.mrb[0].mxu0 %v1420
    %v1488 = vpop.f32.mrb[0].mxu0
    %v1489 = vadd.f32 %v1329, %v1488
    %v1490 = vpop.f32.mrb[0].mxu0
    %v1491 = vadd.f32 %v1329, %v1490
    %v1492 = vpop.f32.mrb[0].mxu0
    %v1493 = vadd.f32 %v1334, %v1492
    %v1494 = vpop.f32.mrb[0].mxu0
    %v1495 = vadd.f32 %v1334, %v1494
    %1496 = vmatprep.mubr.bf16.mxu0 0
    %1497 = vmatmul.mubr.bf16.gmra.mrb[0].mxu0 %v1421
    %v1498 = vpop.f32.mrb[0].mxu0
    %v1499 = vadd.f32 %v1339, %v1498
    %v1500 = vpop.f32.mrb[0].mxu0
    %v1501 = vadd.f32 %v1339, %v1500
    %v1502 = vpop.f32.mrb[0].mxu0
    %v1503 = vadd.f32 %v1344, %v1502
    %v1504 = vpop.f32.mrb[0].mxu0
    %v1505 = vadd.f32 %v1344, %v1504
    %1506 = vmatprep.mubr.bf16.mxu0 0
    %1507 = vmatmul.mubr.bf16.gmra.mrb[0].mxu0 %v1422
    %v1508 = vpop.f32.mrb[0].mxu0
    %v1509 = vadd.f32 %v1349, %v1508
    %v1510 = vpop.f32.mrb[0].mxu0
    %v1511 = vadd.f32 %v1349, %v1510
    %v1512 = vpop.f32.mrb[0].mxu0
    %v1513 = vadd.f32 %v1354, %v1512
    %v1514 = vpop.f32.mrb[0].mxu0
    %v1515 = vadd.f32 %v1354, %v1514
    %1516 = vmatprep.mubr.bf16.mxu0 0
    %1517 = vmatmul.mubr.bf16.gmra.mrb[0].mxu0 %v1423
    %v1518 = vpop.f32.mrb[0].mxu0
    %v1519 = vadd.f32 %v1359, %v1518
    %v1520 = vpop.f32.mrb[0].mxu0
    %v1521 = vadd.f32 %v1359, %v1520
    %v1522 = vpop.f32.mrb[0].mxu0
    %v1523 = vadd.f32 %v1364, %v1522
    %v1524 = vpop.f32.mrb[0].mxu0
    %v1525 = vadd.f32 %v1364, %v1524
    %1526 = vmatprep.mubr.bf16.mxu0 0
    %1527 = vmatmul.mubr.bf16.gmra.mrb[0].mxu0 %v1424
    %v1528 = vpop.f32.mrb[0].mxu0
    %v1529 = vadd.f32 %v1369, %v1528
    %v1530 = vpop.f32.mrb[0].mxu0
    %v1531 = vadd.f32 %v1369, %v1530
    %v1532 = vpop.f32.mrb[0].mxu0
    %v1533 = vadd.f32 %v1374, %v1532
    %v1534 = vpop.f32.mrb[0].mxu0
    %v1535 = vadd.f32 %v1374, %v1534
    %1536 = vmatprep.mubr.bf16.mxu0 0
    %1537 = vmatmul.mubr.bf16.gmra.mrb[0].mxu0 %v1425
    %v1538 = vpop.f32.mrb[0].mxu0
    %v1539 = vadd.f32 %v1379, %v1538
    %v1540 = vpop.f32.mrb[0].mxu0
    %v1541 = vadd.f32 %v1379, %v1540
    %v1542 = vpop.f32.mrb[0].mxu0
    %v1543 = vadd.f32 %v1384, %v1542
    %v1544 = vpop.f32.mrb[0].mxu0
    %v1545 = vadd.f32 %v1384, %v1544
    %1546 = vdwg.mxu0
    %v1547 = vmax.f32 %v1469, 0.0
    %v1548 = vmax.f32 %v1471, 0.0
    %v1549 = vmax.f32 %v1473, 0.0
    %v1550 = vmax.f32 %v1475, 0.0
    %v1551 = vmax.f32 %v1479, 0.0
    %v1552 = vmax.f32 %v1481, 0.0
    %v1553 = vmax.f32 %v1483, 0.0
    %v1554 = vmax.f32 %v1485, 0.0
    %v1555 = vmax.f32 %v1489, 0.0
    %v1556 = vmax.f32 %v1491, 0.0
    %v1557 = vmax.f32 %v1493, 0.0
    %v1558 = vmax.f32 %v1495, 0.0
    %v1559 = vmax.f32 %v1499, 0.0
    %v1560 = vmax.f32 %v1501, 0.0
    %v1561 = vmax.f32 %v1503, 0.0
    %v1562 = vmax.f32 %v1505, 0.0
    %v1563 = vmax.f32 %v1509, 0.0
    %v1564 = vmax.f32 %v1511, 0.0
    %v1565 = vmax.f32 %v1513, 0.0
    %v1566 = vmax.f32 %v1515, 0.0
    %v1567 = vmax.f32 %v1519, 0.0
    %v1568 = vmax.f32 %v1521, 0.0
    %v1569 = vmax.f32 %v1523, 0.0
    %v1570 = vmax.f32 %v1525, 0.0
    %v1571 = vmax.f32 %v1529, 0.0
    %v1572 = vmax.f32 %v1531, 0.0
    %v1573 = vmax.f32 %v1533, 0.0
    %v1574 = vmax.f32 %v1535, 0.0
    %v1575 = vmax.f32 %v1539, 0.0
    %v1576 = vmax.f32 %v1541, 0.0
    %v1577 = vmax.f32 %v1543, 0.0
    %v1578 = vmax.f32 %v1545, 0.0
    %v1579 = vld [vmem:[%s8] sm:$0xf]
    %v1580 = vld [vmem:[%s8 + $0x4] sm:$0xf]
    %v1581 = vld [vmem:[%s8 + $0x8] sm:$0xf]
    %v1582 = vld [vmem:[%s8 + $0xc] sm:$0xf]
    %v1583 = vld [vmem:[%s8 + $0x10] sm:$0xf]
    %v1584 = vld [vmem:[%s8 + $0x14] sm:$0xf]
    %v1585 = vld [vmem:[%s8 + $0x18] sm:$0xf]
    %v1586 = vld [vmem:[%s8 + $0x1c] sm:$0xf]
    %v1587 = vld [vmem:[%s8 + $0x20] sm:$0xf]
    %v1588 = vld [vmem:[%s8 + $0x24] sm:$0xf]
    %v1589 = vld [vmem:[%s8 + $0x28] sm:$0xf]
    %v1590 = vld [vmem:[%s8 + $0x2c] sm:$0xf]
    %v1591 = vld [vmem:[%s8 + $0x30] sm:$0xf]
    %v1592 = vld [vmem:[%s8 + $0x34] sm:$0xf]
    %v1593 = vld [vmem:[%s8 + $0x38] sm:$0xf]
    %v1594 = vld [vmem:[%s8 + $0x3c] sm:$0xf]
    %v1595 = vpack.c.bf16 %v1549, %v1547
    %v1596 = vpack.c.bf16 %v1550, %v1548
    %v1597 = vpack.c.bf16 %v1553, %v1551
    %v1598 = vpack.c.bf16 %v1554, %v1552
    %v1599 = vpack.c.bf16 %v1557, %v1555
    %v1600 = vpack.c.bf16 %v1558, %v1556
    %v1601 = vpack.c.bf16 %v1561, %v1559
    %v1602 = vpack.c.bf16 %v1562, %v1560
    %v1603 = vpack.c.bf16 %v1565, %v1563
    %v1604 = vpack.c.bf16 %v1566, %v1564
    %v1605 = vpack.c.bf16 %v1569, %v1567
    %v1606 = vpack.c.bf16 %v1570, %v1568
    %v1607 = vpack.c.bf16 %v1573, %v1571
    %v1608 = vpack.c.bf16 %v1574, %v1572
    %v1609 = vpack.c.bf16 %v1577, %v1575
    %v1610 = vpack.c.bf16 %v1578, %v1576
    %v1611 = vld [vmem:[%s9] sm:$0xff]
    %v1612 = vld [vmem:[%s9 + $0x8] sm:$0xff]
    %v1613 = vld [vmem:[%s9 + $0x10] sm:$0xff]
    %v1614 = vld [vmem:[%s9 + $0x18] sm:$0xff]
    %v1615 = vld [vmem:[%s9 + $0x20] sm:$0xff]
    %v1616 = vld [vmem:[%s9 + $0x28] sm:$0xff]
    %v1617 = vld [vmem:[%s9 + $0x30] sm:$0xff]
    %v1618 = vld [vmem:[%s9 + $0x38] sm:$0xff]
    %v1619 = vld [vmem:[%s9 + $0x40] sm:$0xff]
    %v1620 = vld [vmem:[%s9 + $0x48] sm:$0xff]
    %v1621 = vld [vmem:[%s9 + $0x50] sm:$0xff]
    %v1622 = vld [vmem:[%s9 + $0x58] sm:$0xff]
    %v1623 = vld [vmem:[%s9 + $0x60] sm:$0xff]
    %v1624 = vld [vmem:[%s9 + $0x68] sm:$0xff]
    %v1625 = vld [vmem:[%s9 + $0x70] sm:$0xff]
    %v1626 = vld [vmem:[%s9 + $0x78] sm:$0xff]
    %1628 = vset.pattern.permute.xlu0 0
    %1629 = vperm.xlu0 %1628, %v1611
    %v1630 = vpop.permute.xlu0 %1629
    %1633 = vset.pattern.permute.xlu0 0
    %1634 = vperm.xlu0 %1633, %v1612
    %v1635 = vpop.permute.xlu0 %1634
    %1638 = vset.pattern.permute.xlu0 0
    %1639 = vperm.xlu0 %1638, %v1613
    %v1640 = vpop.permute.xlu0 %1639
    %1643 = vset.pattern.permute.xlu0 0
    %1644 = vperm.xlu0 %1643, %v1614
    %v1645 = vpop.permute.xlu0 %1644
    %1648 = vset.pattern.permute.xlu0 0
    %1649 = vperm.xlu0 %1648, %v1615
    %v1650 = vpop.permute.xlu0 %1649
    %1653 = vset.pattern.permute.xlu0 0
    %1654 = vperm.xlu0 %1653, %v1616
    %v1655 = vpop.permute.xlu0 %1654
    %1658 = vset.pattern.permute.xlu0 0
    %1659 = vperm.xlu0 %1658, %v1617
    %v1660 = vpop.permute.xlu0 %1659
    %1663 = vset.pattern.permute.xlu0 0
    %1664 = vperm.xlu0 %1663, %v1618
    %v1665 = vpop.permute.xlu0 %1664
    %1668 = vset.pattern.permute.xlu0 0
    %1669 = vperm.xlu0 %1668, %v1619
    %v1670 = vpop.permute.xlu0 %1669
    %1673 = vset.pattern.permute.xlu0 0
    %1674 = vperm.xlu0 %1673, %v1620
    %v1675 = vpop.permute.xlu0 %1674
    %1678 = vset.pattern.permute.xlu0 0
    %1679 = vperm.xlu0 %1678, %v1621
    %v1680 = vpop.permute.xlu0 %1679
    %1683 = vset.pattern.permute.xlu0 0
    %1684 = vperm.xlu0 %1683, %v1622
    %v1685 = vpop.permute.xlu0 %1684
    %1688 = vset.pattern.permute.xlu0 0
    %1689 = vperm.xlu0 %1688, %v1623
    %v1690 = vpop.permute.xlu0 %1689
    %1693 = vset.pattern.permute.xlu0 0
    %1694 = vperm.xlu0 %1693, %v1624
    %v1695 = vpop.permute.xlu0 %1694
    %1698 = vset.pattern.permute.xlu0 0
    %1699 = vperm.xlu0 %1698, %v1625
    %v1700 = vpop.permute.xlu0 %1699
    %1703 = vset.pattern.permute.xlu0 0
    %1704 = vperm.xlu0 %1703, %v1626
    %v1705 = vpop.permute.xlu0 %1704
    %v1723 = vunpack.c.l.b16 %v1579
    %v1724 = vunpack.c.l.b16 %v1580
    %v1725 = vunpack.c.l.b16 %v1581
    %v1726 = vunpack.c.l.b16 %v1582
    %v1727 = vunpack.c.l.b16 %v1583
    %v1728 = vunpack.c.l.b16 %v1584
    %v1729 = vunpack.c.l.b16 %v1585
    %v1730 = vunpack.c.l.b16 %v1586
    %v1731 = vunpack.c.l.b16 %v1587
    %v1732 = vunpack.c.l.b16 %v1588
    %v1733 = vunpack.c.l.b16 %v1589
    %v1734 = vunpack.c.l.b16 %v1590
    %v1735 = vunpack.c.l.b16 %v1591
    %v1736 = vunpack.c.l.b16 %v1592
    %v1737 = vunpack.c.l.b16 %v1593
    %v1738 = vunpack.c.l.b16 %v1594
    %v1739 = vpack.c.b16 %v1724, %v1723
    %v1740 = vpack.c.b16 %v1726, %v1725
    %v1741 = vpack.c.b16 %v1728, %v1727
    %v1742 = vpack.c.b16 %v1730, %v1729
    %v1743 = vpack.c.b16 %v1732, %v1731
    %v1744 = vpack.c.b16 %v1734, %v1733
    %v1745 = vpack.c.b16 %v1736, %v1735
    %v1746 = vpack.c.b16 %v1738, %v1737
    %1755 = vmatprep.subr.bf16.mxu0 %v1596
    %1756 = vmatpush1.bf16.msra.mxu0 %v1595
    %1757 = vmatprep.subr.bf16.mxu0 %v1598
    %1758 = vmatpush1.bf16.msra.mxu0 %v1597
    %1759 = vmatprep.subr.bf16.mxu0 %v1600
    %1760 = vmatpush1.bf16.msra.mxu0 %v1599
    %1761 = vmatprep.subr.bf16.mxu0 %v1602
    %1762 = vmatpush1.bf16.msra.mxu0 %v1601
    %1763 = vmatprep.subr.bf16.mxu0 %v1604
    %1764 = vmatpush1.bf16.msra.mxu0 %v1603
    %1765 = vmatprep.subr.bf16.mxu0 %v1606
    %1766 = vmatpush1.bf16.msra.mxu0 %v1605
    %1767 = vmatprep.subr.bf16.mxu0 %v1608
    %1768 = vmatpush1.bf16.msra.mxu0 %v1607
    %1769 = vmatprep.subr.bf16.mxu0 %v1610
    %1770 = vmatpush1.bf16.msra.mxu0 %v1609
    %1771 = vmatprep.subr.bf16.mxu0 0
    %1772 = vmatpush1.bf16.msra.mxu0 0
    %1773 = vmatprep.subr.bf16.mxu0 0
    %1774 = vmatpush1.bf16.msra.mxu0 0
    %1775 = vmatprep.subr.bf16.mxu0 0
    %1776 = vmatpush1.bf16.msra.mxu0 0
    %1777 = vmatprep.subr.bf16.mxu0 0
    %1778 = vmatpush1.bf16.msra.mxu0 0
    %1779 = vmatprep.subr.bf16.mxu0 0
    %1780 = vmatpush1.bf16.msra.mxu0 0
    %1781 = vmatprep.subr.bf16.mxu0 0
    %1782 = vmatpush1.bf16.msra.mxu0 0
    %1783 = vmatprep.subr.bf16.mxu0 0
    %1784 = vmatpush1.bf16.msra.mxu0 0
    %1785 = vmatprep.subr.bf16.mxu0 0
    %1786 = vmatpush1.bf16.msra.mxu0 0
    %1787 = vmatprep.mubr.bf16.mxu0 0
    %1788 = vmatmul.mubr.bf16.gmra.mrb[0].mxu0 %v1739
    %v1789 = vpop.f32.mrb[0].mxu0
    %v1790 = vadd.f32 %v1630, %v1789
    %v1791 = vpop.f32.mrb[0].mxu0
    %v1792 = vadd.f32 %v1630, %v1791
    %v1793 = vpop.f32.mrb[0].mxu0
    %v1794 = vadd.f32 %v1635, %v1793
    %v1795 = vpop.f32.mrb[0].mxu0
    %v1796 = vadd.f32 %v1635, %v1795
    %1797 = vmatprep.mubr.bf16.mxu0 0
    %1798 = vmatmul.mubr.bf16.gmra.mrb[0].mxu0 %v1740
    %v1799 = vpop.f32.mrb[0].mxu0
    %v1800 = vadd.f32 %v1640, %v1799
    %v1801 = vpop.f32.mrb[0].mxu0
    %v1802 = vadd.f32 %v1640, %v1801
    %v1803 = vpop.f32.mrb[0].mxu0
    %v1804 = vadd.f32 %v1645, %v1803
    %v1805 = vpop.f32.mrb[0].mxu0
    %v1806 = vadd.f32 %v1645, %v1805
    %1807 = vmatprep.mubr.bf16.mxu0 0
    %1808 = vmatmul.mubr.bf16.gmra.mrb[0].mxu0 %v1741
    %v1809 = vpop.f32.mrb[0].mxu0
    %v1810 = vadd.f32 %v1650, %v1809
    %v1811 = vpop.f32.mrb[0].mxu0
    %v1812 = vadd.f32 %v1650, %v1811
    %v1813 = vpop.f32.mrb[0].mxu0
    %v1814 = vadd.f32 %v1655, %v1813
    %v1815 = vpop.f32.mrb[0].mxu0
    %v1816 = vadd.f32 %v1655, %v1815
    %1817 = vmatprep.mubr.bf16.mxu0 0
    %1818 = vmatmul.mubr.bf16.gmra.mrb[0].mxu0 %v1742
    %v1819 = vpop.f32.mrb[0].mxu0
    %v1820 = vadd.f32 %v1660, %v1819
    %v1821 = vpop.f32.mrb[0].mxu0
    %v1822 = vadd.f32 %v1660, %v1821
    %v1823 = vpop.f32.mrb[0].mxu0
    %v1824 = vadd.f32 %v1665, %v1823
    %v1825 = vpop.f32.mrb[0].mxu0
    %v1826 = vadd.f32 %v1665, %v1825
    %1827 = vmatprep.mubr.bf16.mxu0 0
    %1828 = vmatmul.mubr.bf16.gmra.mrb[0].mxu0 %v1743
    %v1829 = vpop.f32.mrb[0].mxu0
    %v1830 = vadd.f32 %v1670, %v1829
    %v1831 = vpop.f32.mrb[0].mxu0
    %v1832 = vadd.f32 %v1670, %v1831
    %v1833 = vpop.f32.mrb[0].mxu0
    %v1834 = vadd.f32 %v1675, %v1833
    %v1835 = vpop.f32.mrb[0].mxu0
    %v1836 = vadd.f32 %v1675, %v1835
    %1837 = vmatprep.mubr.bf16.mxu0 0
    %1838 = vmatmul.mubr.bf16.gmra.mrb[0].mxu0 %v1744
    %v1839 = vpop.f32.mrb[0].mxu0
    %v1840 = vadd.f32 %v1680, %v1839
    %v1841 = vpop.f32.mrb[0].mxu0
    %v1842 = vadd.f32 %v1680, %v1841
    %v1843 = vpop.f32.mrb[0].mxu0
    %v1844 = vadd.f32 %v1685, %v1843
    %v1845 = vpop.f32.mrb[0].mxu0
    %v1846 = vadd.f32 %v1685, %v1845
    %1847 = vmatprep.mubr.bf16.mxu0 0
    %1848 = vmatmul.mubr.bf16.gmra.mrb[0].mxu0 %v1745
    %v1849 = vpop.f32.mrb[0].mxu0
    %v1850 = vadd.f32 %v1690, %v1849
    %v1851 = vpop.f32.mrb[0].mxu0
    %v1852 = vadd.f32 %v1690, %v1851
    %v1853 = vpop.f32.mrb[0].mxu0
    %v1854 = vadd.f32 %v1695, %v1853
    %v1855 = vpop.f32.mrb[0].mxu0
    %v1856 = vadd.f32 %v1695, %v1855
    %1857 = vmatprep.mubr.bf16.mxu0 0
    %1858 = vmatmul.mubr.bf16.gmra.mrb[0].mxu0 %v1746
    %v1859 = vpop.f32.mrb[0].mxu0
    %v1860 = vadd.f32 %v1700, %v1859
    %v1861 = vpop.f32.mrb[0].mxu0
    %v1862 = vadd.f32 %v1700, %v1861
    %v1863 = vpop.f32.mrb[0].mxu0
    %v1864 = vadd.f32 %v1705, %v1863
    %v1865 = vpop.f32.mrb[0].mxu0
    %v1866 = vadd.f32 %v1705, %v1865
    %1867 = vdwg.mxu0
    %v1868 = vmax.f32 %v1790, 0.0
    %v1869 = vmax.f32 %v1792, 0.0
    %v1870 = vmax.f32 %v1794, 0.0
    %v1871 = vmax.f32 %v1796, 0.0
    %v1872 = vmax.f32 %v1800, 0.0
    %v1873 = vmax.f32 %v1802, 0.0
    %v1874 = vmax.f32 %v1804, 0.0
    %v1875 = vmax.f32 %v1806, 0.0
    %v1876 = vmax.f32 %v1810, 0.0
    %v1877 = vmax.f32 %v1812, 0.0
    %v1878 = vmax.f32 %v1814, 0.0
    %v1879 = vmax.f32 %v1816, 0.0
    %v1880 = vmax.f32 %v1820, 0.0
    %v1881 = vmax.f32 %v1822, 0.0
    %v1882 = vmax.f32 %v1824, 0.0
    %v1883 = vmax.f32 %v1826, 0.0
    %v1884 = vmax.f32 %v1830, 0.0
    %v1885 = vmax.f32 %v1832, 0.0
    %v1886 = vmax.f32 %v1834, 0.0
    %v1887 = vmax.f32 %v1836, 0.0
    %v1888 = vmax.f32 %v1840, 0.0
    %v1889 = vmax.f32 %v1842, 0.0
    %v1890 = vmax.f32 %v1844, 0.0
    %v1891 = vmax.f32 %v1846, 0.0
    %v1892 = vmax.f32 %v1850, 0.0
    %v1893 = vmax.f32 %v1852, 0.0
    %v1894 = vmax.f32 %v1854, 0.0
    %v1895 = vmax.f32 %v1856, 0.0
    %v1896 = vmax.f32 %v1860, 0.0
    %v1897 = vmax.f32 %v1862, 0.0
    %v1898 = vmax.f32 %v1864, 0.0
    %v1899 = vmax.f32 %v1866, 0.0
    %v1900 = vld [vmem:[%s10] sm:$0x1]
    %v1901 = vpack.c.bf16 %v1870, %v1868
    %v1902 = vpack.c.bf16 %v1871, %v1869
    %v1903 = vpack.c.bf16 %v1874, %v1872
    %v1904 = vpack.c.bf16 %v1875, %v1873
    %v1905 = vpack.c.bf16 %v1878, %v1876
    %v1906 = vpack.c.bf16 %v1879, %v1877
    %v1907 = vpack.c.bf16 %v1882, %v1880
    %v1908 = vpack.c.bf16 %v1883, %v1881
    %v1909 = vpack.c.bf16 %v1886, %v1884
    %v1910 = vpack.c.bf16 %v1887, %v1885
    %v1911 = vpack.c.bf16 %v1890, %v1888
    %v1912 = vpack.c.bf16 %v1891, %v1889
    %v1913 = vpack.c.bf16 %v1894, %v1892
    %v1914 = vpack.c.bf16 %v1895, %v1893
    %v1915 = vpack.c.bf16 %v1898, %v1896
    %v1916 = vpack.c.bf16 %v1899, %v1897
    %v1917 = vld [vmem:[%s11] sm:$0x3]
    %1919 = vset.pattern.permute.xlu0 0
    %1920 = vperm.xlu0 %1919, %v1917
    %v1921 = vpop.permute.xlu0 %1920
    %1923 = vmatprep.subr.bf16.mxu0 %v1902
    %1924 = vmatpush1.bf16.msra.mxu0 %v1901
    %1925 = vmatprep.subr.bf16.mxu0 %v1904
    %1926 = vmatpush1.bf16.msra.mxu0 %v1903
    %1927 = vmatprep.subr.bf16.mxu0 %v1906
    %1928 = vmatpush1.bf16.msra.mxu0 %v1905
    %1929 = vmatprep.subr.bf16.mxu0 %v1908
    %1930 = vmatpush1.bf16.msra.mxu0 %v1907
    %1931 = vmatprep.subr.bf16.mxu0 %v1910
    %1932 = vmatpush1.bf16.msra.mxu0 %v1909
    %1933 = vmatprep.subr.bf16.mxu0 %v1912
    %1934 = vmatpush1.bf16.msra.mxu0 %v1911
    %1935 = vmatprep.subr.bf16.mxu0 %v1914
    %1936 = vmatpush1.bf16.msra.mxu0 %v1913
    %1937 = vmatprep.subr.bf16.mxu0 %v1916
    %1938 = vmatpush1.bf16.msra.mxu0 %v1915
    %1939 = vmatprep.subr.bf16.mxu0 0
    %1940 = vmatpush1.bf16.msra.mxu0 0
    %1941 = vmatprep.subr.bf16.mxu0 0
    %1942 = vmatpush1.bf16.msra.mxu0 0
    %1943 = vmatprep.subr.bf16.mxu0 0
    %1944 = vmatpush1.bf16.msra.mxu0 0
    %1945 = vmatprep.subr.bf16.mxu0 0
    %1946 = vmatpush1.bf16.msra.mxu0 0
    %1947 = vmatprep.subr.bf16.mxu0 0
    %1948 = vmatpush1.bf16.msra.mxu0 0
    %1949 = vmatprep.subr.bf16.mxu0 0
    %1950 = vmatpush1.bf16.msra.mxu0 0
    %1951 = vmatprep.subr.bf16.mxu0 0
    %1952 = vmatpush1.bf16.msra.mxu0 0
    %1953 = vmatprep.subr.bf16.mxu0 0
    %1954 = vmatpush1.bf16.msra.mxu0 0
    %1955 = vmatprep.mubr.bf16.mxu0 0
    %1956 = vmatmul.mubr.bf16.gmra.mrb[0].mxu0 %v1900
    %v1957 = vpop.f32.mrb[0].mxu0
    %v1958 = vadd.f32 %v1921, %v1957
    %v1959 = vpop.f32.mrb[0].mxu0
    %v1960 = vadd.f32 %v1921, %v1959
    %v1961 = vpop.f32.mrb[0].mxu0
    %v1962 = vpop.f32.mrb[0].mxu0
    %1963 = vdwg.mxu0
    %v1964 = vlaneseq
    %v1965 = vshrl.u32 %v1964, 7
    %vm1966 = vcmp.eq.s32.totalorder %v1965, 0
    %v1967 = vxor.u32 %v1958, 2147483648
    %v1968 = vxor.u32 %v1960, 2147483648
    %v1969 = vmul.f32 %v1967, 1.442695
    %v1970 = vpow.pop %v1969
    %v1971 = vmul.f32 %v1968, 1.442695
    %v1972 = vpow.pop %v1971
    %v1973 = vadd.f32 %v1970, 1.0
    %v1974 = vadd.f32 %v1972, 1.0
    %v1975 = vrcp.pop %v1973
    %v1976 = vmul.f32 1.0, %v1975
    %v1977 = vrcp.pop %v1974
    %v1978 = vmul.f32 1.0, %v1977
    %v1979 = vmul.f32 %v1958, 1.442695
    %v1980 = vpow.pop %v1979
    %v1981 = vmul.f32 %v1960, 1.442695
    %v1982 = vpow.pop %v1981
    %v1983 = vsel %vm1966, %v1976, %v1980
    %v1984 = vsel %vm1966, %v1978, %v1982
    %v1987 = vcombine.low %v1983, %v1984
    %v1989 = vunpack.c.l.s4 1983009808
    %v1990 = vunpack.c.0.s8 %v1989
    %v1991 = vlaneseq
    %v1992 = vshrl.u32 %v1991, 7
    %v1993 = vsub.s32 %v1990, %v1992
    %v1994 = vrot.slane %v1987, %v1993
    %1996 = vst [vmem:[#allocation2] sm:$0xf] %v1994
    // Predicated region
    $region50: #{tpu_custom_call.1} parent=1 // pred_check
      _
    $region51: #{tpu_custom_call.1} parent=1 // pred_check_branch
      %1998 = sbr.rel (0) target = $region53
    $region52: #{tpu_custom_call.1} parent=1 // pred_region
      %s2000 = ssub.s32 64, 64
      %2001 = vsyncadd [#allocation3], %s2000
      %s2003 = sshll.u32 [#allocation2], 4
      %s2004 = int_to_ptr.vmem [resolvable:$true] %s2003
      %2006 = dma.vmem_to_hbm [thread:$0]  %s2004, 64, %s12, [#allocation3]
    $region53: #{tpu_custom_call.1} parent=1 // pred_fallthru
      _
    // Predicated region
    $region54: #{tpu_custom_call.1} parent=1 // pred_check
      _
    $region55: #{tpu_custom_call.1} parent=1 // pred_check_branch
      %2008 = sbr.rel (0) target = $region57
    $region56: #{tpu_custom_call.1} parent=1 // pred_region
      %2009 = dma.done [#allocation3], 64
    $region57: #{tpu_custom_call.1} parent=1 // pred_fallthru
      _
    %2010 = vsyncpa [#allocation3], 1

</llo_original>
